<compile_context>
chip_gen: v6e
topology: v6e:2x2x1
jax: 0.10.0
libtpu: 0.0.40
codegen_flags: <defaults>
</compile_context>

<pallas_src>
import functools

import numpy as np
import jax
import jax.numpy as jnp
from jax.experimental import pallas as pl
from jax.experimental.pallas import tpu as pltpu


def _shift_lanes(x, s):
    """y[..., p] = x[..., p - s] with zero fill; s is a static Python int."""
    n = x.shape[-1]
    if s == 0:
        return x
    if s > 0:
        pad = jnp.zeros(x.shape[:-1] + (s,), x.dtype)
        return jnp.concatenate([pad, x[..., : n - s]], axis=-1)
    pad = jnp.zeros(x.shape[:-1] + (-s,), x.dtype)
    return jnp.concatenate([x[..., -s:], pad], axis=-1)


def _fuse_enhance_kernel(col_ref, wsa_ref, w1r_ref, w2r_ref, w1d_ref, w2d_ref,
                         r_ref, d_ref, r_out_ref, d_out_ref, *, H, W):
    HW = H * W
    r = r_ref[0]                                    # (C, HW) float32
    d = d_ref[0]

    # ---------------- SpatialAttention(r * d): channel-max -> 7x7 conv (pad 3) -> sigmoid
    m = jnp.max(r * d, axis=0, keepdims=True)       # (1, HW)
    col = col_ref[...]                              # (1, HW) int32: col[p] = p mod W

    # column-shifted copies: cs[kx][:, p] = m[:, p + (kx-3)] if that column exists, else 0
    cs = []
    for kx in range(7):
        dx = kx - 3
        shifted = _shift_lanes(m, -dx)
        src_col = col + dx
        valid = jnp.logical_and(src_col >= 0, src_col < W)
        cs.append(jnp.where(valid, shifted, 0.0))

    acc = jnp.zeros((1, HW), jnp.float32)
    for ky in range(7):
        dy = ky - 3
        t = cs[0] * wsa_ref[ky, 0]                  # SMEM scalar * vector FMAs
        for kx in range(1, 7):
            t = t + cs[kx] * wsa_ref[ky, kx]
        # row shift by a multiple of W; out-of-image rows are zero-filled by the shift
        acc = acc + _shift_lanes(t, -dy * W)
    sa = jax.nn.sigmoid(acc)                        # (1, HW)

    # ---------------- shared spatial gate
    r_f = r * sa                                    # (C, HW), broadcast over sublanes
    d_f = d * sa

    # ---------------- ChannelAttention: global max pool -> C -> C//16 -> C -> sigmoid
    def channel_gate(x_f, w1t_ref, w2_ref):
        pooled = jnp.max(x_f, axis=1, keepdims=True)                    # (C, 1)
        hidden = jnp.sum(w1t_ref[...] * pooled, axis=0, keepdims=True)  # (1, Cr)
        hidden = jnp.maximum(hidden, 0.0)
        gate = jnp.sum(w2_ref[...] * hidden, axis=1, keepdims=True)     # (C, 1)
        return jax.nn.sigmoid(gate)

    r_ca = channel_gate(r_f, w1r_ref, w2r_ref)      # (C, 1)
    d_ca = channel_gate(d_f, w1d_ref, w2d_ref)      # (C, 1)

    r_out_ref[0] = (r * r_ca).astype(r_out_ref.dtype)
    d_out_ref[0] = (d * d_ca).astype(d_out_ref.dtype)


def fuse_enhance_forward(r, d, params):
    assert r.shape == d.shape, "rgb and depth should have same size"
    B, C, H, W = r.shape
    HW = H * W
    Cr = params['w2_r'].shape[1]

    # lane-dense (B, C, H*W) view (free: contiguous minor-dim collapse)
    r2 = r.reshape(B, C, HW)
    d2 = d.reshape(B, C, HW)
    # column index of every flattened pixel (constant; used for conv edge masking)
    col_ids = jnp.asarray(np.tile(np.arange(W, dtype=np.int32), H)[None, :])   # (1, HW)
    # fc1 weights transposed once at setup so both channel-MLP weights are (C, Cr)
    w1r_t = params['w1_r'].T
    w1d_t = params['w1_d'].T

    kernel = functools.partial(_fuse_enhance_kernel, H=H, W=W)
    act_spec = lambda: pl.BlockSpec((1, C, HW), lambda b: (b, 0, 0))

    r_out, d_out = pl.pallas_call(
        kernel,
        out_shape=(jax.ShapeDtypeStruct((B, C, HW), r.dtype),
                   jax.ShapeDtypeStruct((B, C, HW), d.dtype)),
        grid=(B,),
        in_specs=[
            pl.BlockSpec((1, HW), lambda b: (0, 0)),                 # col ids
            pl.BlockSpec(memory_space=pltpu.MemorySpace.SMEM),       # 7x7 conv weight
            pl.BlockSpec((C, Cr), lambda b: (0, 0)),                 # W1_rgb^T
            pl.BlockSpec((C, Cr), lambda b: (0, 0)),                 # W2_rgb
            pl.BlockSpec((C, Cr), lambda b: (0, 0)),                 # W1_depth^T
            pl.BlockSpec((C, Cr), lambda b: (0, 0)),                 # W2_depth
            act_spec(),                                              # r
            act_spec(),                                              # d
        ],
        out_specs=(act_spec(), act_spec()),
        compiler_params=pltpu.CompilerParams(dimension_semantics=("parallel",)),
    )(col_ids, params['w_sa'], w1r_t, params['w2_r'], w1d_t, params['w2_d'], r2, d2)

    return r_out.reshape(B, C, H, W), d_out.reshape(B, C, H, W)


# ----------------------------------------------------------------------------
# pure-JAX reference (mirrors the PyTorch forward) for a correctness check
# ----------------------------------------------------------------------------
def reference_forward(r, d, params):
    mul_fuse = r * d
    m = jnp.max(mul_fuse, axis=1, keepdims=True)                       # (B,1,H,W)
    conv = jax.lax.conv_general_dilated(
        m, params['w_sa'][None, None, :, :], window_strides=(1, 1),
        padding=((3, 3), (3, 3)), dimension_numbers=('NCHW', 'OIHW', 'NCHW'))
    sa = jax.nn.sigmoid(conv)
    r_f = r * sa
    d_f = d * sa

    def channel_att(x, w1, w2):
        p = jnp.max(x, axis=(2, 3))                                    # (B, C)
        h = jnp.maximum(p @ w1.T, 0.0)                                 # (B, Cr)
        return jax.nn.sigmoid(h @ w2.T)                                # (B, C)

    r_ca = channel_att(r_f, params['w1_r'], params['w2_r'])[:, :, None, None]
    d_ca = channel_att(d_f, params['w1_d'], params['w2_d'])[:, :, None, None]
    return r * r_ca, d * d_ca


def init_params(key, C):
    Cr = C // 16                    # ChannelAttention hardcodes the //16 reduction
    ks = jax.random.split(key, 5)
    f32 = jnp.float32
    return dict(
        w_sa=jax.random.normal(ks[0], (7, 7), f32) * 0.1,              # conv1 of SpatialAttention
        w1_r=jax.random.normal(ks[1], (Cr, C), f32) * (C ** -0.5),     # rgb fc1   (Cr, C)
        w2_r=jax.random.normal(ks[2], (C, Cr), f32) * (Cr ** -0.5),    # rgb fc2   (C, Cr)
        w1_d=jax.random.normal(ks[3], (Cr, C), f32) * (C ** -0.5),     # depth fc1
        w2_d=jax.random.normal(ks[4], (C, Cr), f32) * (Cr ** -0.5),    # depth fc2
    )


# ----------------------------------------------------------------------------
if __name__ == "__main__":
    B, C, H, W = 2, 32, 16, 16      # C must be >= 16 (ChannelAttention reduces by //16)

    key = jax.random.PRNGKey(0)
    kr, kd, kp = jax.random.split(key, 3)
    r = jax.random.normal(kr, (B, C, H, W), jnp.float32)
    d = jax.random.normal(kd, (B, C, H, W), jnp.float32)
    params = init_params(kp, C)

    r_out, d_out = fuse_enhance_forward(r, d, params)
    r_out = jax.block_until_ready(r_out)
    d_out = jax.block_until_ready(d_out)

    r_ref, d_ref = reference_forward(r, d, params)
    assert np.allclose(np.asarray(r_out), np.asarray(r_ref), atol=1e-4, rtol=1e-4)
    assert np.allclose(np.asarray(d_out), np.asarray(d_ref), atol=1e-4, rtol=1e-4)

    print("KERNEL_OK")
</pallas_src>

<mosaic_0001>
module attributes {stable_mosaic.version = 11 : i64} {
  func.func @_fuse_enhance_kernel(%arg0: i32, %arg1: memref<1x256xi32, #tpu.memory_space<vmem>>, %arg2: memref<7x7xf32, #tpu.memory_space<smem>>, %arg3: memref<32x2xf32, #tpu.memory_space<vmem>>, %arg4: memref<32x2xf32, #tpu.memory_space<vmem>>, %arg5: memref<32x2xf32, #tpu.memory_space<vmem>>, %arg6: memref<32x2xf32, #tpu.memory_space<vmem>>, %arg7: memref<1x32x256xf32, #tpu.memory_space<vmem>>, %arg8: memref<1x32x256xf32, #tpu.memory_space<vmem>>, %arg9: memref<1x32x256xf32, #tpu.memory_space<vmem>>, %arg10: memref<1x32x256xf32, #tpu.memory_space<vmem>>) attributes {dimension_semantics = [#tpu.dimension_semantics<parallel>], iteration_bounds = array<i64: 2>, scalar_prefetch = 0 : i64, scratch_operands = 0 : i64, tpu.core_type = #tpu.core_type<tc>, window_params = [{pipeline_mode = #tpu.pipeline_mode<synchronous>, transform_indices = @transform_0, window_bounds = array<i64: 1, 256>}, {transform_indices = @transform_1, window_bounds = array<i64: 7, 7>}, {pipeline_mode = #tpu.pipeline_mode<synchronous>, transform_indices = @transform_2, window_bounds = array<i64: 32, 2>}, {pipeline_mode = #tpu.pipeline_mode<synchronous>, transform_indices = @transform_3, window_bounds = array<i64: 32, 2>}, {pipeline_mode = #tpu.pipeline_mode<synchronous>, transform_indices = @transform_4, window_bounds = array<i64: 32, 2>}, {pipeline_mode = #tpu.pipeline_mode<synchronous>, transform_indices = @transform_5, window_bounds = array<i64: 32, 2>}, {transform_indices = @transform_6, window_bounds = array<i64: 1, 32, 256>}, {transform_indices = @transform_7, window_bounds = array<i64: 1, 32, 256>}, {transform_indices = @transform_8, window_bounds = array<i64: 1, 32, 256>}, {transform_indices = @transform_9, window_bounds = array<i64: 1, 32, 256>}]} {
    %c0 = arith.constant 0 : index
    %c0_0 = arith.constant 0 : index
    %c0_1 = arith.constant 0 : index
    %0 = vector.load %arg7[%c0, %c0_0, %c0_1] : memref<1x32x256xf32, #tpu.memory_space<vmem>>, vector<1x32x256xf32>
    %1 = vector.shape_cast %0 : vector<1x32x256xf32> to vector<32x256xf32>
    %c0_2 = arith.constant 0 : index
    %c0_3 = arith.constant 0 : index
    %c0_4 = arith.constant 0 : index
    %2 = vector.load %arg8[%c0_2, %c0_3, %c0_4] : memref<1x32x256xf32, #tpu.memory_space<vmem>>, vector<1x32x256xf32>
    %3 = vector.shape_cast %2 : vector<1x32x256xf32> to vector<32x256xf32>
    %4 = arith.mulf %1, %3 : vector<32x256xf32>
    %cst = arith.constant dense<0xFF800000> : vector<256xf32>
    %5 = vector.multi_reduction <maximumf>, %4, %cst [0] : vector<32x256xf32> to vector<256xf32>
    %6 = vector.shape_cast %5 : vector<256xf32> to vector<1x256xf32>
    %c0_5 = arith.constant 0 : index
    %c0_6 = arith.constant 0 : index
    %7 = vector.load %arg1[%c0_5, %c0_6] : memref<1x256xi32, #tpu.memory_space<vmem>>, vector<1x256xi32>
    %cst_7 = arith.constant 0.000000e+00 : f32
    %8 = vector.broadcast %cst_7 : f32 to vector<1x3xf32>
    %9 = vector.extract_strided_slice %6 {offsets = [0, 0], sizes = [1, 253], strides = [1, 1]} : vector<1x256xf32> to vector<1x253xf32>
    %10 = tpu.concatenate %8, %9 in 1 : vector<1x3xf32>, vector<1x253xf32> -> vector<1x256xf32>
    %c-3_i32 = arith.constant -3 : i32
    %11 = vector.broadcast %c-3_i32 : i32 to vector<1x256xi32>
    %12 = arith.addi %7, %11 : vector<1x256xi32>
    %c0_i32 = arith.constant 0 : i32
    %13 = vector.broadcast %c0_i32 : i32 to vector<1x256xi32>
    %14 = arith.cmpi sge, %12, %13 : vector<1x256xi32>
    %c16_i32 = arith.constant 16 : i32
    %15 = vector.broadcast %c16_i32 : i32 to vector<1x256xi32>
    %16 = arith.cmpi slt, %12, %15 : vector<1x256xi32>
    %17 = arith.andi %14, %16 : vector<1x256xi1>
    %cst_8 = arith.constant 0.000000e+00 : f32
    %18 = vector.broadcast %cst_8 : f32 to vector<1x256xf32>
    %19 = arith.select %17, %10, %18 : vector<1x256xi1>, vector<1x256xf32>
    %cst_9 = arith.constant 0.000000e+00 : f32
    %20 = vector.broadcast %cst_9 : f32 to vector<1x2xf32>
    %21 = vector.extract_strided_slice %6 {offsets = [0, 0], sizes = [1, 254], strides = [1, 1]} : vector<1x256xf32> to vector<1x254xf32>
    %22 = tpu.concatenate %20, %21 in 1 : vector<1x2xf32>, vector<1x254xf32> -> vector<1x256xf32>
    %c-2_i32 = arith.constant -2 : i32
    %23 = vector.broadcast %c-2_i32 : i32 to vector<1x256xi32>
    %24 = arith.addi %7, %23 : vector<1x256xi32>
    %c0_i32_10 = arith.constant 0 : i32
    %25 = vector.broadcast %c0_i32_10 : i32 to vector<1x256xi32>
    %26 = arith.cmpi sge, %24, %25 : vector<1x256xi32>
    %c16_i32_11 = arith.constant 16 : i32
    %27 = vector.broadcast %c16_i32_11 : i32 to vector<1x256xi32>
    %28 = arith.cmpi slt, %24, %27 : vector<1x256xi32>
    %29 = arith.andi %26, %28 : vector<1x256xi1>
    %cst_12 = arith.constant 0.000000e+00 : f32
    %30 = vector.broadcast %cst_12 : f32 to vector<1x256xf32>
    %31 = arith.select %29, %22, %30 : vector<1x256xi1>, vector<1x256xf32>
    %cst_13 = arith.constant 0.000000e+00 : f32
    %32 = vector.broadcast %cst_13 : f32 to vector<1x1xf32>
    %33 = vector.extract_strided_slice %6 {offsets = [0, 0], sizes = [1, 255], strides = [1, 1]} : vector<1x256xf32> to vector<1x255xf32>
    %34 = tpu.concatenate %32, %33 in 1 : vector<1x1xf32>, vector<1x255xf32> -> vector<1x256xf32>
    %c-1_i32 = arith.constant -1 : i32
    %35 = vector.broadcast %c-1_i32 : i32 to vector<1x256xi32>
    %36 = arith.addi %7, %35 : vector<1x256xi32>
    %c0_i32_14 = arith.constant 0 : i32
    %37 = vector.broadcast %c0_i32_14 : i32 to vector<1x256xi32>
    %38 = arith.cmpi sge, %36, %37 : vector<1x256xi32>
    %c16_i32_15 = arith.constant 16 : i32
    %39 = vector.broadcast %c16_i32_15 : i32 to vector<1x256xi32>
    %40 = arith.cmpi slt, %36, %39 : vector<1x256xi32>
    %41 = arith.andi %38, %40 : vector<1x256xi1>
    %cst_16 = arith.constant 0.000000e+00 : f32
    %42 = vector.broadcast %cst_16 : f32 to vector<1x256xf32>
    %43 = arith.select %41, %34, %42 : vector<1x256xi1>, vector<1x256xf32>
    %c0_i32_17 = arith.constant 0 : i32
    %44 = vector.broadcast %c0_i32_17 : i32 to vector<1x256xi32>
    %45 = arith.addi %7, %44 : vector<1x256xi32>
    %c0_i32_18 = arith.constant 0 : i32
    %46 = vector.broadcast %c0_i32_18 : i32 to vector<1x256xi32>
    %47 = arith.cmpi sge, %45, %46 : vector<1x256xi32>
    %c16_i32_19 = arith.constant 16 : i32
    %48 = vector.broadcast %c16_i32_19 : i32 to vector<1x256xi32>
    %49 = arith.cmpi slt, %45, %48 : vector<1x256xi32>
    %50 = arith.andi %47, %49 : vector<1x256xi1>
    %cst_20 = arith.constant 0.000000e+00 : f32
    %51 = vector.broadcast %cst_20 : f32 to vector<1x256xf32>
    %52 = arith.select %50, %6, %51 : vector<1x256xi1>, vector<1x256xf32>
    %cst_21 = arith.constant 0.000000e+00 : f32
    %53 = vector.broadcast %cst_21 : f32 to vector<1x1xf32>
    %54 = vector.extract_strided_slice %6 {offsets = [0, 1], sizes = [1, 255], strides = [1, 1]} : vector<1x256xf32> to vector<1x255xf32>
    %55 = tpu.concatenate %54, %53 in 1 : vector<1x255xf32>, vector<1x1xf32> -> vector<1x256xf32>
    %c1_i32 = arith.constant 1 : i32
    %56 = vector.broadcast %c1_i32 : i32 to vector<1x256xi32>
    %57 = arith.addi %7, %56 : vector<1x256xi32>
    %c0_i32_22 = arith.constant 0 : i32
    %58 = vector.broadcast %c0_i32_22 : i32 to vector<1x256xi32>
    %59 = arith.cmpi sge, %57, %58 : vector<1x256xi32>
    %c16_i32_23 = arith.constant 16 : i32
    %60 = vector.broadcast %c16_i32_23 : i32 to vector<1x256xi32>
    %61 = arith.cmpi slt, %57, %60 : vector<1x256xi32>
    %62 = arith.andi %59, %61 : vector<1x256xi1>
    %cst_24 = arith.constant 0.000000e+00 : f32
    %63 = vector.broadcast %cst_24 : f32 to vector<1x256xf32>
    %64 = arith.select %62, %55, %63 : vector<1x256xi1>, vector<1x256xf32>
    %cst_25 = arith.constant 0.000000e+00 : f32
    %65 = vector.broadcast %cst_25 : f32 to vector<1x2xf32>
    %66 = vector.extract_strided_slice %6 {offsets = [0, 2], sizes = [1, 254], strides = [1, 1]} : vector<1x256xf32> to vector<1x254xf32>
    %67 = tpu.concatenate %66, %65 in 1 : vector<1x254xf32>, vector<1x2xf32> -> vector<1x256xf32>
    %c2_i32 = arith.constant 2 : i32
    %68 = vector.broadcast %c2_i32 : i32 to vector<1x256xi32>
    %69 = arith.addi %7, %68 : vector<1x256xi32>
    %c0_i32_26 = arith.constant 0 : i32
    %70 = vector.broadcast %c0_i32_26 : i32 to vector<1x256xi32>
    %71 = arith.cmpi sge, %69, %70 : vector<1x256xi32>
    %c16_i32_27 = arith.constant 16 : i32
    %72 = vector.broadcast %c16_i32_27 : i32 to vector<1x256xi32>
    %73 = arith.cmpi slt, %69, %72 : vector<1x256xi32>
    %74 = arith.andi %71, %73 : vector<1x256xi1>
    %cst_28 = arith.constant 0.000000e+00 : f32
    %75 = vector.broadcast %cst_28 : f32 to vector<1x256xf32>
    %76 = arith.select %74, %67, %75 : vector<1x256xi1>, vector<1x256xf32>
    %cst_29 = arith.constant 0.000000e+00 : f32
    %77 = vector.broadcast %cst_29 : f32 to vector<1x3xf32>
    %78 = vector.extract_strided_slice %6 {offsets = [0, 3], sizes = [1, 253], strides = [1, 1]} : vector<1x256xf32> to vector<1x253xf32>
    %79 = tpu.concatenate %78, %77 in 1 : vector<1x253xf32>, vector<1x3xf32> -> vector<1x256xf32>
    %c3_i32 = arith.constant 3 : i32
    %80 = vector.broadcast %c3_i32 : i32 to vector<1x256xi32>
    %81 = arith.addi %7, %80 : vector<1x256xi32>
    %c0_i32_30 = arith.constant 0 : i32
    %82 = vector.broadcast %c0_i32_30 : i32 to vector<1x256xi32>
    %83 = arith.cmpi sge, %81, %82 : vector<1x256xi32>
    %c16_i32_31 = arith.constant 16 : i32
    %84 = vector.broadcast %c16_i32_31 : i32 to vector<1x256xi32>
    %85 = arith.cmpi slt, %81, %84 : vector<1x256xi32>
    %86 = arith.andi %83, %85 : vector<1x256xi1>
    %cst_32 = arith.constant 0.000000e+00 : f32
    %87 = vector.broadcast %cst_32 : f32 to vector<1x256xf32>
    %88 = arith.select %86, %79, %87 : vector<1x256xi1>, vector<1x256xf32>
    %cst_33 = arith.constant 0.000000e+00 : f32
    %89 = vector.broadcast %cst_33 : f32 to vector<1x256xf32>
    %c0_34 = arith.constant 0 : index
    %c0_35 = arith.constant 0 : index
    %90 = memref.load %arg2[%c0_34, %c0_35] : memref<7x7xf32, #tpu.memory_space<smem>>
    %91 = vector.broadcast %90 : f32 to vector<1x256xf32>
    %92 = arith.mulf %19, %91 : vector<1x256xf32>
    %c0_36 = arith.constant 0 : index
    %c1 = arith.constant 1 : index
    %93 = memref.load %arg2[%c0_36, %c1] : memref<7x7xf32, #tpu.memory_space<smem>>
    %94 = vector.broadcast %93 : f32 to vector<1x256xf32>
    %95 = arith.mulf %31, %94 : vector<1x256xf32>
    %96 = arith.addf %92, %95 : vector<1x256xf32>
    %c0_37 = arith.constant 0 : index
    %c2 = arith.constant 2 : index
    %97 = memref.load %arg2[%c0_37, %c2] : memref<7x7xf32, #tpu.memory_space<smem>>
    %98 = vector.broadcast %97 : f32 to vector<1x256xf32>
    %99 = arith.mulf %43, %98 : vector<1x256xf32>
    %100 = arith.addf %96, %99 : vector<1x256xf32>
    %c0_38 = arith.constant 0 : index
    %c3 = arith.constant 3 : index
    %101 = memref.load %arg2[%c0_38, %c3] : memref<7x7xf32, #tpu.memory_space<smem>>
    %102 = vector.broadcast %101 : f32 to vector<1x256xf32>
    %103 = arith.mulf %52, %102 : vector<1x256xf32>
    %104 = arith.addf %100, %103 : vector<1x256xf32>
    %c0_39 = arith.constant 0 : index
    %c4 = arith.constant 4 : index
    %105 = memref.load %arg2[%c0_39, %c4] : memref<7x7xf32, #tpu.memory_space<smem>>
    %106 = vector.broadcast %105 : f32 to vector<1x256xf32>
    %107 = arith.mulf %64, %106 : vector<1x256xf32>
    %108 = arith.addf %104, %107 : vector<1x256xf32>
    %c0_40 = arith.constant 0 : index
    %c5 = arith.constant 5 : index
    %109 = memref.load %arg2[%c0_40, %c5] : memref<7x7xf32, #tpu.memory_space<smem>>
    %110 = vector.broadcast %109 : f32 to vector<1x256xf32>
    %111 = arith.mulf %76, %110 : vector<1x256xf32>
    %112 = arith.addf %108, %111 : vector<1x256xf32>
    %c0_41 = arith.constant 0 : index
    %c6 = arith.constant 6 : index
    %113 = memref.load %arg2[%c0_41, %c6] : memref<7x7xf32, #tpu.memory_space<smem>>
    %114 = vector.broadcast %113 : f32 to vector<1x256xf32>
    %115 = arith.mulf %88, %114 : vector<1x256xf32>
    %116 = arith.addf %112, %115 : vector<1x256xf32>
    %cst_42 = arith.constant 0.000000e+00 : f32
    %117 = vector.broadcast %cst_42 : f32 to vector<1x48xf32>
    %118 = vector.extract_strided_slice %116 {offsets = [0, 0], sizes = [1, 208], strides = [1, 1]} : vector<1x256xf32> to vector<1x208xf32>
    %119 = tpu.concatenate %117, %118 in 1 : vector<1x48xf32>, vector<1x208xf32> -> vector<1x256xf32>
    %120 = arith.addf %89, %119 : vector<1x256xf32>
    %c1_43 = arith.constant 1 : index
    %c0_44 = arith.constant 0 : index
    %121 = memref.load %arg2[%c1_43, %c0_44] : memref<7x7xf32, #tpu.memory_space<smem>>
    %122 = vector.broadcast %121 : f32 to vector<1x256xf32>
    %123 = arith.mulf %19, %122 : vector<1x256xf32>
    %c1_45 = arith.constant 1 : index
    %c1_46 = arith.constant 1 : index
    %124 = memref.load %arg2[%c1_45, %c1_46] : memref<7x7xf32, #tpu.memory_space<smem>>
    %125 = vector.broadcast %124 : f32 to vector<1x256xf32>
    %126 = arith.mulf %31, %125 : vector<1x256xf32>
    %127 = arith.addf %123, %126 : vector<1x256xf32>
    %c1_47 = arith.constant 1 : index
    %c2_48 = arith.constant 2 : index
    %128 = memref.load %arg2[%c1_47, %c2_48] : memref<7x7xf32, #tpu.memory_space<smem>>
    %129 = vector.broadcast %128 : f32 to vector<1x256xf32>
    %130 = arith.mulf %43, %129 : vector<1x256xf32>
    %131 = arith.addf %127, %130 : vector<1x256xf32>
    %c1_49 = arith.constant 1 : index
    %c3_50 = arith.constant 3 : index
    %132 = memref.load %arg2[%c1_49, %c3_50] : memref<7x7xf32, #tpu.memory_space<smem>>
    %133 = vector.broadcast %132 : f32 to vector<1x256xf32>
    %134 = arith.mulf %52, %133 : vector<1x256xf32>
    %135 = arith.addf %131, %134 : vector<1x256xf32>
    %c1_51 = arith.constant 1 : index
    %c4_52 = arith.constant 4 : index
    %136 = memref.load %arg2[%c1_51, %c4_52] : memref<7x7xf32, #tpu.memory_space<smem>>
    %137 = vector.broadcast %136 : f32 to vector<1x256xf32>
    %138 = arith.mulf %64, %137 : vector<1x256xf32>
    %139 = arith.addf %135, %138 : vector<1x256xf32>
    %c1_53 = arith.constant 1 : index
    %c5_54 = arith.constant 5 : index
    %140 = memref.load %arg2[%c1_53, %c5_54] : memref<7x7xf32, #tpu.memory_space<smem>>
    %141 = vector.broadcast %140 : f32 to vector<1x256xf32>
    %142 = arith.mulf %76, %141 : vector<1x256xf32>
    %143 = arith.addf %139, %142 : vector<1x256xf32>
    %c1_55 = arith.constant 1 : index
    %c6_56 = arith.constant 6 : index
    %144 = memref.load %arg2[%c1_55, %c6_56] : memref<7x7xf32, #tpu.memory_space<smem>>
    %145 = vector.broadcast %144 : f32 to vector<1x256xf32>
    %146 = arith.mulf %88, %145 : vector<1x256xf32>
    %147 = arith.addf %143, %146 : vector<1x256xf32>
    %cst_57 = arith.constant 0.000000e+00 : f32
    %148 = vector.broadcast %cst_57 : f32 to vector<1x32xf32>
    %149 = vector.extract_strided_slice %147 {offsets = [0, 0], sizes = [1, 224], strides = [1, 1]} : vector<1x256xf32> to vector<1x224xf32>
    %150 = tpu.concatenate %148, %149 in 1 : vector<1x32xf32>, vector<1x224xf32> -> vector<1x256xf32>
    %151 = arith.addf %120, %150 : vector<1x256xf32>
    %c2_58 = arith.constant 2 : index
    %c0_59 = arith.constant 0 : index
    %152 = memref.load %arg2[%c2_58, %c0_59] : memref<7x7xf32, #tpu.memory_space<smem>>
    %153 = vector.broadcast %152 : f32 to vector<1x256xf32>
    %154 = arith.mulf %19, %153 : vector<1x256xf32>
    %c2_60 = arith.constant 2 : index
    %c1_61 = arith.constant 1 : index
    %155 = memref.load %arg2[%c2_60, %c1_61] : memref<7x7xf32, #tpu.memory_space<smem>>
    %156 = vector.broadcast %155 : f32 to vector<1x256xf32>
    %157 = arith.mulf %31, %156 : vector<1x256xf32>
    %158 = arith.addf %154, %157 : vector<1x256xf32>
    %c2_62 = arith.constant 2 : index
    %c2_63 = arith.constant 2 : index
    %159 = memref.load %arg2[%c2_62, %c2_63] : memref<7x7xf32, #tpu.memory_space<smem>>
    %160 = vector.broadcast %159 : f32 to vector<1x256xf32>
    %161 = arith.mulf %43, %160 : vector<1x256xf32>
    %162 = arith.addf %158, %161 : vector<1x256xf32>
    %c2_64 = arith.constant 2 : index
    %c3_65 = arith.constant 3 : index
    %163 = memref.load %arg2[%c2_64, %c3_65] : memref<7x7xf32, #tpu.memory_space<smem>>
    %164 = vector.broadcast %163 : f32 to vector<1x256xf32>
    %165 = arith.mulf %52, %164 : vector<1x256xf32>
    %166 = arith.addf %162, %165 : vector<1x256xf32>
    %c2_66 = arith.constant 2 : index
    %c4_67 = arith.constant 4 : index
    %167 = memref.load %arg2[%c2_66, %c4_67] : memref<7x7xf32, #tpu.memory_space<smem>>
    %168 = vector.broadcast %167 : f32 to vector<1x256xf32>
    %169 = arith.mulf %64, %168 : vector<1x256xf32>
    %170 = arith.addf %166, %169 : vector<1x256xf32>
    %c2_68 = arith.constant 2 : index
    %c5_69 = arith.constant 5 : index
    %171 = memref.load %arg2[%c2_68, %c5_69] : memref<7x7xf32, #tpu.memory_space<smem>>
    %172 = vector.broadcast %171 : f32 to vector<1x256xf32>
    %173 = arith.mulf %76, %172 : vector<1x256xf32>
    %174 = arith.addf %170, %173 : vector<1x256xf32>
    %c2_70 = arith.constant 2 : index
    %c6_71 = arith.constant 6 : index
    %175 = memref.load %arg2[%c2_70, %c6_71] : memref<7x7xf32, #tpu.memory_space<smem>>
    %176 = vector.broadcast %175 : f32 to vector<1x256xf32>
    %177 = arith.mulf %88, %176 : vector<1x256xf32>
    %178 = arith.addf %174, %177 : vector<1x256xf32>
    %cst_72 = arith.constant 0.000000e+00 : f32
    %179 = vector.broadcast %cst_72 : f32 to vector<1x16xf32>
    %180 = vector.extract_strided_slice %178 {offsets = [0, 0], sizes = [1, 240], strides = [1, 1]} : vector<1x256xf32> to vector<1x240xf32>
    %181 = tpu.concatenate %179, %180 in 1 : vector<1x16xf32>, vector<1x240xf32> -> vector<1x256xf32>
    %182 = arith.addf %151, %181 : vector<1x256xf32>
    %c3_73 = arith.constant 3 : index
    %c0_74 = arith.constant 0 : index
    %183 = memref.load %arg2[%c3_73, %c0_74] : memref<7x7xf32, #tpu.memory_space<smem>>
    %184 = vector.broadcast %183 : f32 to vector<1x256xf32>
    %185 = arith.mulf %19, %184 : vector<1x256xf32>
    %c3_75 = arith.constant 3 : index
    %c1_76 = arith.constant 1 : index
    %186 = memref.load %arg2[%c3_75, %c1_76] : memref<7x7xf32, #tpu.memory_space<smem>>
    %187 = vector.broadcast %186 : f32 to vector<1x256xf32>
    %188 = arith.mulf %31, %187 : vector<1x256xf32>
    %189 = arith.addf %185, %188 : vector<1x256xf32>
    %c3_77 = arith.constant 3 : index
    %c2_78 = arith.constant 2 : index
    %190 = memref.load %arg2[%c3_77, %c2_78] : memref<7x7xf32, #tpu.memory_space<smem>>
    %191 = vector.broadcast %190 : f32 to vector<1x256xf32>
    %192 = arith.mulf %43, %191 : vector<1x256xf32>
    %193 = arith.addf %189, %192 : vector<1x256xf32>
    %c3_79 = arith.constant 3 : index
    %c3_80 = arith.constant 3 : index
    %194 = memref.load %arg2[%c3_79, %c3_80] : memref<7x7xf32, #tpu.memory_space<smem>>
    %195 = vector.broadcast %194 : f32 to vector<1x256xf32>
    %196 = arith.mulf %52, %195 : vector<1x256xf32>
    %197 = arith.addf %193, %196 : vector<1x256xf32>
    %c3_81 = arith.constant 3 : index
    %c4_82 = arith.constant 4 : index
    %198 = memref.load %arg2[%c3_81, %c4_82] : memref<7x7xf32, #tpu.memory_space<smem>>
    %199 = vector.broadcast %198 : f32 to vector<1x256xf32>
    %200 = arith.mulf %64, %199 : vector<1x256xf32>
    %201 = arith.addf %197, %200 : vector<1x256xf32>
    %c3_83 = arith.constant 3 : index
    %c5_84 = arith.constant 5 : index
    %202 = memref.load %arg2[%c3_83, %c5_84] : memref<7x7xf32, #tpu.memory_space<smem>>
    %203 = vector.broadcast %202 : f32 to vector<1x256xf32>
    %204 = arith.mulf %76, %203 : vector<1x256xf32>
    %205 = arith.addf %201, %204 : vector<1x256xf32>
    %c3_85 = arith.constant 3 : index
    %c6_86 = arith.constant 6 : index
    %206 = memref.load %arg2[%c3_85, %c6_86] : memref<7x7xf32, #tpu.memory_space<smem>>
    %207 = vector.broadcast %206 : f32 to vector<1x256xf32>
    %208 = arith.mulf %88, %207 : vector<1x256xf32>
    %209 = arith.addf %205, %208 : vector<1x256xf32>
    %210 = arith.addf %182, %209 : vector<1x256xf32>
    %c4_87 = arith.constant 4 : index
    %c0_88 = arith.constant 0 : index
    %211 = memref.load %arg2[%c4_87, %c0_88] : memref<7x7xf32, #tpu.memory_space<smem>>
    %212 = vector.broadcast %211 : f32 to vector<1x256xf32>
    %213 = arith.mulf %19, %212 : vector<1x256xf32>
    %c4_89 = arith.constant 4 : index
    %c1_90 = arith.constant 1 : index
    %214 = memref.load %arg2[%c4_89, %c1_90] : memref<7x7xf32, #tpu.memory_space<smem>>
    %215 = vector.broadcast %214 : f32 to vector<1x256xf32>
    %216 = arith.mulf %31, %215 : vector<1x256xf32>
    %217 = arith.addf %213, %216 : vector<1x256xf32>
    %c4_91 = arith.constant 4 : index
    %c2_92 = arith.constant 2 : index
    %218 = memref.load %arg2[%c4_91, %c2_92] : memref<7x7xf32, #tpu.memory_space<smem>>
    %219 = vector.broadcast %218 : f32 to vector<1x256xf32>
    %220 = arith.mulf %43, %219 : vector<1x256xf32>
    %221 = arith.addf %217, %220 : vector<1x256xf32>
    %c4_93 = arith.constant 4 : index
    %c3_94 = arith.constant 3 : index
    %222 = memref.load %arg2[%c4_93, %c3_94] : memref<7x7xf32, #tpu.memory_space<smem>>
    %223 = vector.broadcast %222 : f32 to vector<1x256xf32>
    %224 = arith.mulf %52, %223 : vector<1x256xf32>
    %225 = arith.addf %221, %224 : vector<1x256xf32>
    %c4_95 = arith.constant 4 : index
    %c4_96 = arith.constant 4 : index
    %226 = memref.load %arg2[%c4_95, %c4_96] : memref<7x7xf32, #tpu.memory_space<smem>>
    %227 = vector.broadcast %226 : f32 to vector<1x256xf32>
    %228 = arith.mulf %64, %227 : vector<1x256xf32>
    %229 = arith.addf %225, %228 : vector<1x256xf32>
    %c4_97 = arith.constant 4 : index
    %c5_98 = arith.constant 5 : index
    %230 = memref.load %arg2[%c4_97, %c5_98] : memref<7x7xf32, #tpu.memory_space<smem>>
    %231 = vector.broadcast %230 : f32 to vector<1x256xf32>
    %232 = arith.mulf %76, %231 : vector<1x256xf32>
    %233 = arith.addf %229, %232 : vector<1x256xf32>
    %c4_99 = arith.constant 4 : index
    %c6_100 = arith.constant 6 : index
    %234 = memref.load %arg2[%c4_99, %c6_100] : memref<7x7xf32, #tpu.memory_space<smem>>
    %235 = vector.broadcast %234 : f32 to vector<1x256xf32>
    %236 = arith.mulf %88, %235 : vector<1x256xf32>
    %237 = arith.addf %233, %236 : vector<1x256xf32>
    %cst_101 = arith.constant 0.000000e+00 : f32
    %238 = vector.broadcast %cst_101 : f32 to vector<1x16xf32>
    %239 = vector.extract_strided_slice %237 {offsets = [0, 16], sizes = [1, 240], strides = [1, 1]} : vector<1x256xf32> to vector<1x240xf32>
    %240 = tpu.concatenate %239, %238 in 1 : vector<1x240xf32>, vector<1x16xf32> -> vector<1x256xf32>
    %241 = arith.addf %210, %240 : vector<1x256xf32>
    %c5_102 = arith.constant 5 : index
    %c0_103 = arith.constant 0 : index
    %242 = memref.load %arg2[%c5_102, %c0_103] : memref<7x7xf32, #tpu.memory_space<smem>>
    %243 = vector.broadcast %242 : f32 to vector<1x256xf32>
    %244 = arith.mulf %19, %243 : vector<1x256xf32>
    %c5_104 = arith.constant 5 : index
    %c1_105 = arith.constant 1 : index
    %245 = memref.load %arg2[%c5_104, %c1_105] : memref<7x7xf32, #tpu.memory_space<smem>>
    %246 = vector.broadcast %245 : f32 to vector<1x256xf32>
    %247 = arith.mulf %31, %246 : vector<1x256xf32>
    %248 = arith.addf %244, %247 : vector<1x256xf32>
    %c5_106 = arith.constant 5 : index
    %c2_107 = arith.constant 2 : index
    %249 = memref.load %arg2[%c5_106, %c2_107] : memref<7x7xf32, #tpu.memory_space<smem>>
    %250 = vector.broadcast %249 : f32 to vector<1x256xf32>
    %251 = arith.mulf %43, %250 : vector<1x256xf32>
    %252 = arith.addf %248, %251 : vector<1x256xf32>
    %c5_108 = arith.constant 5 : index
    %c3_109 = arith.constant 3 : index
    %253 = memref.load %arg2[%c5_108, %c3_109] : memref<7x7xf32, #tpu.memory_space<smem>>
    %254 = vector.broadcast %253 : f32 to vector<1x256xf32>
    %255 = arith.mulf %52, %254 : vector<1x256xf32>
    %256 = arith.addf %252, %255 : vector<1x256xf32>
    %c5_110 = arith.constant 5 : index
    %c4_111 = arith.constant 4 : index
    %257 = memref.load %arg2[%c5_110, %c4_111] : memref<7x7xf32, #tpu.memory_space<smem>>
    %258 = vector.broadcast %257 : f32 to vector<1x256xf32>
    %259 = arith.mulf %64, %258 : vector<1x256xf32>
    %260 = arith.addf %256, %259 : vector<1x256xf32>
    %c5_112 = arith.constant 5 : index
    %c5_113 = arith.constant 5 : index
    %261 = memref.load %arg2[%c5_112, %c5_113] : memref<7x7xf32, #tpu.memory_space<smem>>
    %262 = vector.broadcast %261 : f32 to vector<1x256xf32>
    %263 = arith.mulf %76, %262 : vector<1x256xf32>
    %264 = arith.addf %260, %263 : vector<1x256xf32>
    %c5_114 = arith.constant 5 : index
    %c6_115 = arith.constant 6 : index
    %265 = memref.load %arg2[%c5_114, %c6_115] : memref<7x7xf32, #tpu.memory_space<smem>>
    %266 = vector.broadcast %265 : f32 to vector<1x256xf32>
    %267 = arith.mulf %88, %266 : vector<1x256xf32>
    %268 = arith.addf %264, %267 : vector<1x256xf32>
    %cst_116 = arith.constant 0.000000e+00 : f32
    %269 = vector.broadcast %cst_116 : f32 to vector<1x32xf32>
    %270 = vector.extract_strided_slice %268 {offsets = [0, 32], sizes = [1, 224], strides = [1, 1]} : vector<1x256xf32> to vector<1x224xf32>
    %271 = tpu.concatenate %270, %269 in 1 : vector<1x224xf32>, vector<1x32xf32> -> vector<1x256xf32>
    %272 = arith.addf %241, %271 : vector<1x256xf32>
    %c6_117 = arith.constant 6 : index
    %c0_118 = arith.constant 0 : index
    %273 = memref.load %arg2[%c6_117, %c0_118] : memref<7x7xf32, #tpu.memory_space<smem>>
    %274 = vector.broadcast %273 : f32 to vector<1x256xf32>
    %275 = arith.mulf %19, %274 : vector<1x256xf32>
    %c6_119 = arith.constant 6 : index
    %c1_120 = arith.constant 1 : index
    %276 = memref.load %arg2[%c6_119, %c1_120] : memref<7x7xf32, #tpu.memory_space<smem>>
    %277 = vector.broadcast %276 : f32 to vector<1x256xf32>
    %278 = arith.mulf %31, %277 : vector<1x256xf32>
    %279 = arith.addf %275, %278 : vector<1x256xf32>
    %c6_121 = arith.constant 6 : index
    %c2_122 = arith.constant 2 : index
    %280 = memref.load %arg2[%c6_121, %c2_122] : memref<7x7xf32, #tpu.memory_space<smem>>
    %281 = vector.broadcast %280 : f32 to vector<1x256xf32>
    %282 = arith.mulf %43, %281 : vector<1x256xf32>
    %283 = arith.addf %279, %282 : vector<1x256xf32>
    %c6_123 = arith.constant 6 : index
    %c3_124 = arith.constant 3 : index
    %284 = memref.load %arg2[%c6_123, %c3_124] : memref<7x7xf32, #tpu.memory_space<smem>>
    %285 = vector.broadcast %284 : f32 to vector<1x256xf32>
    %286 = arith.mulf %52, %285 : vector<1x256xf32>
    %287 = arith.addf %283, %286 : vector<1x256xf32>
    %c6_125 = arith.constant 6 : index
    %c4_126 = arith.constant 4 : index
    %288 = memref.load %arg2[%c6_125, %c4_126] : memref<7x7xf32, #tpu.memory_space<smem>>
    %289 = vector.broadcast %288 : f32 to vector<1x256xf32>
    %290 = arith.mulf %64, %289 : vector<1x256xf32>
    %291 = arith.addf %287, %290 : vector<1x256xf32>
    %c6_127 = arith.constant 6 : index
    %c5_128 = arith.constant 5 : index
    %292 = memref.load %arg2[%c6_127, %c5_128] : memref<7x7xf32, #tpu.memory_space<smem>>
    %293 = vector.broadcast %292 : f32 to vector<1x256xf32>
    %294 = arith.mulf %76, %293 : vector<1x256xf32>
    %295 = arith.addf %291, %294 : vector<1x256xf32>
    %c6_129 = arith.constant 6 : index
    %c6_130 = arith.constant 6 : index
    %296 = memref.load %arg2[%c6_129, %c6_130] : memref<7x7xf32, #tpu.memory_space<smem>>
    %297 = vector.broadcast %296 : f32 to vector<1x256xf32>
    %298 = arith.mulf %88, %297 : vector<1x256xf32>
    %299 = arith.addf %295, %298 : vector<1x256xf32>
    %cst_131 = arith.constant 0.000000e+00 : f32
    %300 = vector.broadcast %cst_131 : f32 to vector<1x48xf32>
    %301 = vector.extract_strided_slice %299 {offsets = [0, 48], sizes = [1, 208], strides = [1, 1]} : vector<1x256xf32> to vector<1x208xf32>
    %302 = tpu.concatenate %301, %300 in 1 : vector<1x208xf32>, vector<1x48xf32> -> vector<1x256xf32>
    %303 = arith.addf %272, %302 : vector<1x256xf32>
    %304 = arith.negf %303 : vector<1x256xf32>
    %305 = math.exp %304 : vector<1x256xf32>
    %cst_132 = arith.constant 1.000000e+00 : f32
    %306 = vector.broadcast %cst_132 : f32 to vector<1x256xf32>
    %307 = arith.addf %306, %305 : vector<1x256xf32>
    %308 = arith.divf %306, %307 : vector<1x256xf32>
    %309 = vector.broadcast %308 : vector<1x256xf32> to vector<32x256xf32>
    %310 = arith.mulf %1, %309 : vector<32x256xf32>
    %311 = vector.broadcast %308 : vector<1x256xf32> to vector<32x256xf32>
    %312 = arith.mulf %3, %311 : vector<32x256xf32>
    %cst_133 = arith.constant dense<0xFF800000> : vector<32xf32>
    %313 = vector.multi_reduction <maximumf>, %310, %cst_133 [1] : vector<32x256xf32> to vector<32xf32>
    %314 = vector.shape_cast %313 : vector<32xf32> to vector<32x1xf32>
    %c0_134 = arith.constant 0 : index
    %c0_135 = arith.constant 0 : index
    %315 = vector.load %arg3[%c0_134, %c0_135] : memref<32x2xf32, #tpu.memory_space<vmem>>, vector<32x2xf32>
    %316 = vector.broadcast %314 : vector<32x1xf32> to vector<32x2xf32>
    %317 = arith.mulf %315, %316 : vector<32x2xf32>
    %cst_136 = arith.constant dense<0.000000e+00> : vector<2xf32>
    %318 = vector.multi_reduction <add>, %317, %cst_136 [0] : vector<32x2xf32> to vector<2xf32>
    %319 = vector.shape_cast %318 : vector<2xf32> to vector<1x2xf32>
    %cst_137 = arith.constant 0.000000e+00 : f32
    %320 = vector.broadcast %cst_137 : f32 to vector<1x2xf32>
    %321 = arith.maximumf %319, %320 : vector<1x2xf32>
    %c0_138 = arith.constant 0 : index
    %c0_139 = arith.constant 0 : index
    %322 = vector.load %arg4[%c0_138, %c0_139] : memref<32x2xf32, #tpu.memory_space<vmem>>, vector<32x2xf32>
    %323 = vector.broadcast %321 : vector<1x2xf32> to vector<32x2xf32>
    %324 = arith.mulf %322, %323 : vector<32x2xf32>
    %cst_140 = arith.constant dense<0.000000e+00> : vector<32xf32>
    %325 = vector.multi_reduction <add>, %324, %cst_140 [1] : vector<32x2xf32> to vector<32xf32>
    %326 = vector.shape_cast %325 : vector<32xf32> to vector<32x1xf32>
    %327 = arith.negf %326 : vector<32x1xf32>
    %328 = math.exp %327 : vector<32x1xf32>
    %cst_141 = arith.constant 1.000000e+00 : f32
    %329 = vector.broadcast %cst_141 : f32 to vector<32x1xf32>
    %330 = arith.addf %329, %328 : vector<32x1xf32>
    %331 = arith.divf %329, %330 : vector<32x1xf32>
    %cst_142 = arith.constant dense<0xFF800000> : vector<32xf32>
    %332 = vector.multi_reduction <maximumf>, %312, %cst_142 [1] : vector<32x256xf32> to vector<32xf32>
    %333 = vector.shape_cast %332 : vector<32xf32> to vector<32x1xf32>
    %c0_143 = arith.constant 0 : index
    %c0_144 = arith.constant 0 : index
    %334 = vector.load %arg5[%c0_143, %c0_144] : memref<32x2xf32, #tpu.memory_space<vmem>>, vector<32x2xf32>
    %335 = vector.broadcast %333 : vector<32x1xf32> to vector<32x2xf32>
    %336 = arith.mulf %334, %335 : vector<32x2xf32>
    %cst_145 = arith.constant dense<0.000000e+00> : vector<2xf32>
    %337 = vector.multi_reduction <add>, %336, %cst_145 [0] : vector<32x2xf32> to vector<2xf32>
    %338 = vector.shape_cast %337 : vector<2xf32> to vector<1x2xf32>
    %cst_146 = arith.constant 0.000000e+00 : f32
    %339 = vector.broadcast %cst_146 : f32 to vector<1x2xf32>
    %340 = arith.maximumf %338, %339 : vector<1x2xf32>
    %c0_147 = arith.constant 0 : index
    %c0_148 = arith.constant 0 : index
    %341 = vector.load %arg6[%c0_147, %c0_148] : memref<32x2xf32, #tpu.memory_space<vmem>>, vector<32x2xf32>
    %342 = vector.broadcast %340 : vector<1x2xf32> to vector<32x2xf32>
    %343 = arith.mulf %341, %342 : vector<32x2xf32>
    %cst_149 = arith.constant dense<0.000000e+00> : vector<32xf32>
    %344 = vector.multi_reduction <add>, %343, %cst_149 [1] : vector<32x2xf32> to vector<32xf32>
    %345 = vector.shape_cast %344 : vector<32xf32> to vector<32x1xf32>
    %346 = arith.negf %345 : vector<32x1xf32>
    %347 = math.exp %346 : vector<32x1xf32>
    %cst_150 = arith.constant 1.000000e+00 : f32
    %348 = vector.broadcast %cst_150 : f32 to vector<32x1xf32>
    %349 = arith.addf %348, %347 : vector<32x1xf32>
    %350 = arith.divf %348, %349 : vector<32x1xf32>
    %351 = vector.broadcast %331 : vector<32x1xf32> to vector<32x256xf32>
    %352 = arith.mulf %1, %351 : vector<32x256xf32>
    %c0_151 = arith.constant 0 : index
    %c0_152 = arith.constant 0 : index
    %c0_153 = arith.constant 0 : index
    %353 = vector.load %arg9[%c0_151, %c0_152, %c0_153] : memref<1x32x256xf32, #tpu.memory_space<vmem>>, vector<1x32x256xf32>
    %354 = vector.shape_cast %353 : vector<1x32x256xf32> to vector<32x256xf32>
    %355 = vector.shape_cast %352 : vector<32x256xf32> to vector<1x32x256xf32>
    tpu.vector_store %arg9[%c0_151, %c0_152, %c0_153], %355 {strides = array<i32>} : memref<1x32x256xf32, #tpu.memory_space<vmem>>, vector<1x32x256xf32>,
    %356 = vector.broadcast %350 : vector<32x1xf32> to vector<32x256xf32>
    %357 = arith.mulf %3, %356 : vector<32x256xf32>
    %c0_154 = arith.constant 0 : index
    %c0_155 = arith.constant 0 : index
    %c0_156 = arith.constant 0 : index
    %358 = vector.load %arg10[%c0_154, %c0_155, %c0_156] : memref<1x32x256xf32, #tpu.memory_space<vmem>>, vector<1x32x256xf32>
    %359 = vector.shape_cast %358 : vector<1x32x256xf32> to vector<32x256xf32>
    %360 = vector.shape_cast %357 : vector<32x256xf32> to vector<1x32x256xf32>
    tpu.vector_store %arg10[%c0_154, %c0_155, %c0_156], %360 {strides = array<i32>} : memref<1x32x256xf32, #tpu.memory_space<vmem>>, vector<1x32x256xf32>,
    return
  }
  func.func @transform_0(%arg0: i32) -> (i32, i32) {
    %c0_i32 = arith.constant 0 : i32
    %c0_i32_0 = arith.constant 0 : i32
    %c0_i32_1 = arith.constant 0 : i32
    return %c0_i32, %c0_i32_0 : i32, i32
  }
  func.func @transform_1(%arg0: i32) -> (i32, i32) {
    %c0_i32 = arith.constant 0 : i32
    %c0_i32_0 = arith.constant 0 : i32
    %c0_i32_1 = arith.constant 0 : i32
    return %c0_i32, %c0_i32_0 : i32, i32
  }
  func.func @transform_2(%arg0: i32) -> (i32, i32) {
    %c0_i32 = arith.constant 0 : i32
    %c0_i32_0 = arith.constant 0 : i32
    %c0_i32_1 = arith.constant 0 : i32
    return %c0_i32, %c0_i32_0 : i32, i32
  }
  func.func @transform_3(%arg0: i32) -> (i32, i32) {
    %c0_i32 = arith.constant 0 : i32
    %c0_i32_0 = arith.constant 0 : i32
    %c0_i32_1 = arith.constant 0 : i32
    return %c0_i32, %c0_i32_0 : i32, i32
  }
  func.func @transform_4(%arg0: i32) -> (i32, i32) {
    %c0_i32 = arith.constant 0 : i32
    %c0_i32_0 = arith.constant 0 : i32
    %c0_i32_1 = arith.constant 0 : i32
    return %c0_i32, %c0_i32_0 : i32, i32
  }
  func.func @transform_5(%arg0: i32) -> (i32, i32) {
    %c0_i32 = arith.constant 0 : i32
    %c0_i32_0 = arith.constant 0 : i32
    %c0_i32_1 = arith.constant 0 : i32
    return %c0_i32, %c0_i32_0 : i32, i32
  }
  func.func @transform_6(%arg0: i32) -> (i32, i32, i32) {
    %c0_i32 = arith.constant 0 : i32
    %c0_i32_0 = arith.constant 0 : i32
    %c0_i32_1 = arith.constant 0 : i32
    return %arg0, %c0_i32, %c0_i32_0 : i32, i32, i32
  }
  func.func @transform_7(%arg0: i32) -> (i32, i32, i32) {
    %c0_i32 = arith.constant 0 : i32
    %c0_i32_0 = arith.constant 0 : i32
    %c0_i32_1 = arith.constant 0 : i32
    return %arg0, %c0_i32, %c0_i32_0 : i32, i32, i32
  }
  func.func @transform_8(%arg0: i32) -> (i32, i32, i32) {
    %c0_i32 = arith.constant 0 : i32
    %c0_i32_0 = arith.constant 0 : i32
    %c0_i32_1 = arith.constant 0 : i32
    return %arg0, %c0_i32, %c0_i32_0 : i32, i32, i32
  }
  func.func @transform_9(%arg0: i32) -> (i32, i32, i32) {
    %c0_i32 = arith.constant 0 : i32
    %c0_i32_0 = arith.constant 0 : i32
    %c0_i32_1 = arith.constant 0 : i32
    return %arg0, %c0_i32, %c0_i32_0 : i32, i32, i32
  }
}

</mosaic_0001>

<llo_original>
// kernel: tpu_custom_call.1
$region0: #{tpu_custom_call.1}
  #allocation0 [shape = 'u32[]', space=smem, size = 0x4, offset = 0x4, fixed_abs, tag = 'smem constant byte address 0x4 - core index']
  #allocation1 [shape = 'u32[144,128]{1,0:T(1,128)}', space=vmem, size = 0x12000, scoped, tag = 'internal scratch']
  %s0 = inlined_call_operand.vmem [shape: s32[1,256], index: 0, kind: input, shape index: {}]
  %s1 = inlined_call_operand.vmem [shape: f32[7,7], index: 1, kind: input, shape index: {}]
  %s2 = inlined_call_operand.vmem [shape: f32[32,2], index: 2, kind: input, shape index: {}]
  %s3 = inlined_call_operand.vmem [shape: f32[32,2], index: 3, kind: input, shape index: {}]
  %s4 = inlined_call_operand.vmem [shape: f32[32,2], index: 4, kind: input, shape index: {}]
  %s5 = inlined_call_operand.vmem [shape: f32[32,2], index: 5, kind: input, shape index: {}]
  %s6 = inlined_call_operand.vmem [shape: f32[2,32,256], index: 6, kind: input, shape index: {}]
  %s7 = inlined_call_operand.hbm [shape: f32[2,32,256], index: 7, kind: input, shape index: {}]
  %s8 = inlined_call_operand.hbm [shape: f32[2,32,256], index: 8, kind: output, shape index: {0}]
  %s9 = inlined_call_operand.hbm [shape: f32[2,32,256], index: 9, kind: output, shape index: {1}]
  %10 = xla_tuple %s8, %s9
  %s11 = sld [smem:[#allocation0]]
  $region81: #{tpu_custom_call.1} parent=0
    _
  %s13 = ssub.s32 1, %s11
  %s14 = scalar_select 0, %s13, %s11
  $region1: #{tpu_custom_call.1} parent=0
    #allocation2 [shape = 'u8[4096]{0}', space=smem, size = 0x1000, scoped, tag = 'input window, operand 1, single buffered']
    #allocation3 [shape = 's32[2]{0}', space=sflag, size = 0x8, scoped, tag = 'scoped memory for tpu_custom_call.1']
    #allocation4 [shape = 's32[2]{0}', space=sflag, size = 0x8, scoped, tag = 'scoped memory for tpu_custom_call.1']
    #allocation5 [shape = 's32[2]{0}', space=sflag, size = 0x8, scoped, tag = 'scoped memory for tpu_custom_call.1']
    #allocation6 [shape = 'u8[65536]{0}', space=vmem, size = 0x10000, scoped, tag = 'input window, operand 7']
    #allocation7 [shape = 'u8[65536]{0}', space=vmem, size = 0x10000, scoped, tag = 'output window, operand 0']
    #allocation8 [shape = 'u8[65536]{0}', space=vmem, size = 0x10000, scoped, tag = 'output window, operand 1']
    #allocation9 [shape = 's32[2]{0}', space=sflag, size = 0x8, scoped, tag = 'scoped memory for tpu_custom_call.1']
    %15 = vsyncpa [#allocation5], 0
    %16 = vsyncpa [#allocation3], 0
    %s17 = scalar_lea.sflag [#allocation3], 1
    %18 = vsyncpa %s17, 0
    %19 = vsyncpa [#allocation4], 0
    %s20 = scalar_lea.sflag [#allocation4], 1
    %21 = vsyncpa %s20, 0
    %22 = vsyncpa [#allocation9], 0
    %s23 = scalar_lea.sflag [#allocation9], 1
    %24 = vsyncpa %s23, 0
    loop: start=0, step=1, limit=4
    $region2: #{tpu_custom_call.1} parent=1 // loop_pre_header
      _
    $region3: #{tpu_custom_call.1} parent=1 // loop_header
      %s26 = sphi 0, %s30
      %p27 = scmp.ge.s32.totalorder %s26, 4
      %s34 = sphi 0, %s34
      %s36 = sphi 0, %s34
      %s37 = sphi 0, %s36
      %s51 = sphi 0, %s37
      %s55 = sphi 0, %s55
      %s57 = sphi 0, %s55
      %s58 = sphi 0, %s57
      %s72 = sphi 0, %s58
      %s76 = sphi 0, %s76
      %s78 = sphi 0, %s76
      %s79 = sphi 0, %s78
      %s93 = sphi 0, %s79
      %s97 = sphi 0, %s97
      %s99 = sphi 0, %s97
      %s100 = sphi 0, %s99
      %s114 = sphi 0, %s100
      %s118 = sphi 0, %s118
      %s120 = sphi 0, %s118
      %s121 = sphi 0, %s120
      %s135 = sphi 0, %s121
      %s139 = sphi 0, %s139
      %s141 = sphi 0, %s139
      %s142 = sphi 0, %s141
      %s156 = sphi 0, %s142
      %s162 = sphi 0, %s164
      %s165 = sphi 0, %s162
      %s166 = sphi 0, %s165
      %s182 = sphi 0, %s166
      %s188 = sphi 0, %s190
      %s191 = sphi 0, %s188
      %s192 = sphi 0, %s191
      %s208 = sphi 0, %s192
      %s214 = sphi 0, %s216
      %s217 = sphi 0, %s214
      %s218 = sphi 0, %s217
      %s234 = sphi 0, %s218
      %s240 = sphi 0, %s242
      %s243 = sphi 0, %s240
      %s244 = sphi 0, %s243
      %s260 = sphi 0, %s244
    $region4: #{tpu_custom_call.1} parent=1 // loop_header_branch
      %29 = sbr.rel (%p27) target = $region8
    $region5: #{tpu_custom_call.1} parent=1 // loop_body
      %s31 = ssub.s32 %s26, 1
      %s32 = ssub.s32 %s26, 2
      %s33 = sadd.s32 %s26, 1
      %s35 = sadd.s32 %s34, 1
      %p38 = scmp.eq.s32.totalorder %s26, 1
      %p39 = scmp.ne.s32.totalorder %s34, %s36
      %p40 = scmp.eq.s32.totalorder %s26, 0
      %p41 = por %p39, %p40
      %p42 = scmp.ne.s32.totalorder %s34, %s36
      %p43 = scmp.eq.s32.totalorder %s31, 1
      %p44 = por %p42, %p43
      %p45 = scmp.ne.s32.totalorder %s36, %s37
      %p46 = scmp.eq.s32.totalorder %s31, 0
      %p47 = por %p45, %p46
      %p48 = scmp.ne.s32.totalorder %s36, %s37
      %p49 = scmp.eq.s32.totalorder %s32, 1
      %p50 = por %p48, %p49
      %p52 = scmp.ne.s32.totalorder %s37, %s51
      %p53 = scmp.eq.s32.totalorder %s32, 0
      %p54 = por %p52, %p53
      %s56 = sadd.s32 %s55, 1
      %p59 = scmp.eq.s32.totalorder %s26, 1
      %p60 = scmp.ne.s32.totalorder %s55, %s57
      %p61 = scmp.eq.s32.totalorder %s26, 0
      %p62 = por %p60, %p61
      %p63 = scmp.ne.s32.totalorder %s55, %s57
      %p64 = scmp.eq.s32.totalorder %s31, 1
      %p65 = por %p63, %p64
      %p66 = scmp.ne.s32.totalorder %s57, %s58
      %p67 = scmp.eq.s32.totalorder %s31, 0
      %p68 = por %p66, %p67
      %p69 = scmp.ne.s32.totalorder %s57, %s58
      %p70 = scmp.eq.s32.totalorder %s32, 1
      %p71 = por %p69, %p70
      %p73 = scmp.ne.s32.totalorder %s58, %s72
      %p74 = scmp.eq.s32.totalorder %s32, 0
      %p75 = por %p73, %p74
      %s77 = sadd.s32 %s76, 1
      %p80 = scmp.eq.s32.totalorder %s26, 1
      %p81 = scmp.ne.s32.totalorder %s76, %s78
      %p82 = scmp.eq.s32.totalorder %s26, 0
      %p83 = por %p81, %p82
      %p84 = scmp.ne.s32.totalorder %s76, %s78
      %p85 = scmp.eq.s32.totalorder %s31, 1
      %p86 = por %p84, %p85
      %p87 = scmp.ne.s32.totalorder %s78, %s79
      %p88 = scmp.eq.s32.totalorder %s31, 0
      %p89 = por %p87, %p88
      %p90 = scmp.ne.s32.totalorder %s78, %s79
      %p91 = scmp.eq.s32.totalorder %s32, 1
      %p92 = por %p90, %p91
      %p94 = scmp.ne.s32.totalorder %s79, %s93
      %p95 = scmp.eq.s32.totalorder %s32, 0
      %p96 = por %p94, %p95
      %s98 = sadd.s32 %s97, 1
      %p101 = scmp.eq.s32.totalorder %s26, 1
      %p102 = scmp.ne.s32.totalorder %s97, %s99
      %p103 = scmp.eq.s32.totalorder %s26, 0
      %p104 = por %p102, %p103
      %p105 = scmp.ne.s32.totalorder %s97, %s99
      %p106 = scmp.eq.s32.totalorder %s31, 1
      %p107 = por %p105, %p106
      %p108 = scmp.ne.s32.totalorder %s99, %s100
      %p109 = scmp.eq.s32.totalorder %s31, 0
      %p110 = por %p108, %p109
      %p111 = scmp.ne.s32.totalorder %s99, %s100
      %p112 = scmp.eq.s32.totalorder %s32, 1
      %p113 = por %p111, %p112
      %p115 = scmp.ne.s32.totalorder %s100, %s114
      %p116 = scmp.eq.s32.totalorder %s32, 0
      %p117 = por %p115, %p116
      %s119 = sadd.s32 %s118, 1
      %p122 = scmp.eq.s32.totalorder %s26, 1
      %p123 = scmp.ne.s32.totalorder %s118, %s120
      %p124 = scmp.eq.s32.totalorder %s26, 0
      %p125 = por %p123, %p124
      %p126 = scmp.ne.s32.totalorder %s118, %s120
      %p127 = scmp.eq.s32.totalorder %s31, 1
      %p128 = por %p126, %p127
      %p129 = scmp.ne.s32.totalorder %s120, %s121
      %p130 = scmp.eq.s32.totalorder %s31, 0
      %p131 = por %p129, %p130
      %p132 = scmp.ne.s32.totalorder %s120, %s121
      %p133 = scmp.eq.s32.totalorder %s32, 1
      %p134 = por %p132, %p133
      %p136 = scmp.ne.s32.totalorder %s121, %s135
      %p137 = scmp.eq.s32.totalorder %s32, 0
      %p138 = por %p136, %p137
      %s140 = sadd.s32 %s139, 1
      %p143 = scmp.eq.s32.totalorder %s26, 1
      %p144 = scmp.ne.s32.totalorder %s139, %s141
      %p145 = scmp.eq.s32.totalorder %s26, 0
      %p146 = por %p144, %p145
      %p147 = scmp.ne.s32.totalorder %s139, %s141
      %p148 = scmp.eq.s32.totalorder %s31, 1
      %p149 = por %p147, %p148
      %p150 = scmp.ne.s32.totalorder %s141, %s142
      %p151 = scmp.eq.s32.totalorder %s31, 0
      %p152 = por %p150, %p151
      %p153 = scmp.ne.s32.totalorder %s141, %s142
      %p154 = scmp.eq.s32.totalorder %s32, 1
      %p155 = por %p153, %p154
      %p157 = scmp.ne.s32.totalorder %s142, %s156
      %p158 = scmp.eq.s32.totalorder %s32, 0
      %p159 = por %p157, %p158
      %s160 = ssub.s32 %s26, %s33
      %p161 = scmp.eq.s32.totalorder %s160, 0
      %s163 = sadd.s32 %s162, 1
      %s164 = scalar_select %p161, %s162, %s163
      %p167 = pneg %p161
      %p168 = scmp.eq.s32.totalorder %s26, 1
      %p169 = por %p167, %p168
      %p170 = scmp.ne.s32.totalorder %s162, %s165
      %p171 = scmp.eq.s32.totalorder %s26, 0
      %p172 = por %p170, %p171
      %p173 = scmp.ne.s32.totalorder %s162, %s165
      %p174 = scmp.eq.s32.totalorder %s31, 1
      %p175 = por %p173, %p174
      %p176 = scmp.ne.s32.totalorder %s165, %s166
      %p177 = scmp.eq.s32.totalorder %s31, 0
      %p178 = por %p176, %p177
      %p179 = scmp.ne.s32.totalorder %s165, %s166
      %p180 = scmp.eq.s32.totalorder %s32, 1
      %p181 = por %p179, %p180
      %p183 = scmp.ne.s32.totalorder %s166, %s182
      %p184 = scmp.eq.s32.totalorder %s32, 0
      %p185 = por %p183, %p184
      %s186 = ssub.s32 %s26, %s33
      %p187 = scmp.eq.s32.totalorder %s186, 0
      %s189 = sadd.s32 %s188, 1
      %s190 = scalar_select %p187, %s188, %s189
      %p193 = pneg %p187
      %p194 = scmp.eq.s32.totalorder %s26, 1
      %p195 = por %p193, %p194
      %p196 = scmp.ne.s32.totalorder %s188, %s191
      %p197 = scmp.eq.s32.totalorder %s26, 0
      %p198 = por %p196, %p197
      %p199 = scmp.ne.s32.totalorder %s188, %s191
      %p200 = scmp.eq.s32.totalorder %s31, 1
      %p201 = por %p199, %p200
      %p202 = scmp.ne.s32.totalorder %s191, %s192
      %p203 = scmp.eq.s32.totalorder %s31, 0
      %p204 = por %p202, %p203
      %p205 = scmp.ne.s32.totalorder %s191, %s192
      %p206 = scmp.eq.s32.totalorder %s32, 1
      %p207 = por %p205, %p206
      %p209 = scmp.ne.s32.totalorder %s192, %s208
      %p210 = scmp.eq.s32.totalorder %s32, 0
      %p211 = por %p209, %p210
      %s212 = ssub.s32 %s26, %s33
      %p213 = scmp.eq.s32.totalorder %s212, 0
      %s215 = sadd.s32 %s214, 1
      %s216 = scalar_select %p213, %s214, %s215
      %p219 = pneg %p213
      %p220 = scmp.eq.s32.totalorder %s26, 1
      %p221 = por %p219, %p220
      %p222 = scmp.ne.s32.totalorder %s214, %s217
      %p223 = scmp.eq.s32.totalorder %s26, 0
      %p224 = por %p222, %p223
      %p225 = scmp.ne.s32.totalorder %s214, %s217
      %p226 = scmp.eq.s32.totalorder %s31, 1
      %p227 = por %p225, %p226
      %p228 = scmp.ne.s32.totalorder %s217, %s218
      %p229 = scmp.eq.s32.totalorder %s31, 0
      %p230 = por %p228, %p229
      %p231 = scmp.ne.s32.totalorder %s217, %s218
      %p232 = scmp.eq.s32.totalorder %s32, 1
      %p233 = por %p231, %p232
      %p235 = scmp.ne.s32.totalorder %s218, %s234
      %p236 = scmp.eq.s32.totalorder %s32, 0
      %p237 = por %p235, %p236
      %s238 = ssub.s32 %s26, %s33
      %p239 = scmp.eq.s32.totalorder %s238, 0
      %s241 = sadd.s32 %s240, 1
      %s242 = scalar_select %p239, %s240, %s241
      %p245 = pneg %p239
      %p246 = scmp.eq.s32.totalorder %s26, 1
      %p247 = por %p245, %p246
      %p248 = scmp.ne.s32.totalorder %s240, %s243
      %p249 = scmp.eq.s32.totalorder %s26, 0
      %p250 = por %p248, %p249
      %p251 = scmp.ne.s32.totalorder %s240, %s243
      %p252 = scmp.eq.s32.totalorder %s31, 1
      %p253 = por %p251, %p252
      %p254 = scmp.ne.s32.totalorder %s243, %s244
      %p255 = scmp.eq.s32.totalorder %s31, 0
      %p256 = por %p254, %p255
      %p257 = scmp.ne.s32.totalorder %s243, %s244
      %p258 = scmp.eq.s32.totalorder %s32, 1
      %p259 = por %p257, %p258
      %p261 = scmp.ne.s32.totalorder %s244, %s260
      %p262 = scmp.eq.s32.totalorder %s32, 0
      %p263 = por %p261, %p262
      %p264 = scmp.le.s32.totalorder 1, %s26
      %p265 = scmp.lt.s32.totalorder %s26, 3
      %p266 = pnand %p264, %p265
      %p267 = pneg %p266
      // Predicated region
      $region9: #{tpu_custom_call.1} parent=5 // pred_check
        _
      $region10: #{tpu_custom_call.1} parent=5 // pred_check_branch
        %269 = sbr.rel (%p266) target = $region12
      $region11: #{tpu_custom_call.1} parent=5 // pred_region
        %s270 = ssub.s32 %s26, 1
        // Predicated region
        $region13: #{tpu_custom_call.1} parent=11 // pred_check
          %p271 = pneg %p47
        $region14: #{tpu_custom_call.1} parent=11 // pred_check_branch
          %273 = sbr.rel (%p271) target = $region16
        $region15: #{tpu_custom_call.1} parent=11 // pred_region
          _
        $region16: #{tpu_custom_call.1} parent=11 // pred_fallthru
          _
        // Predicated region
        $region17: #{tpu_custom_call.1} parent=11 // pred_check
          %p274 = pneg %p68
        $region18: #{tpu_custom_call.1} parent=11 // pred_check_branch
          %276 = sbr.rel (%p274) target = $region20
        $region19: #{tpu_custom_call.1} parent=11 // pred_region
          %s278 = ssub.s32 128, 128
          %279 = vsyncadd [#allocation5], %s278
          %s281 = sshll.u32 %s1, 4
          %s282 = int_to_ptr.vmem [resolvable:$true] %s281
          %284 = dma.vmem_to_smem %s282, 128, [#allocation2], [#allocation5]
        $region20: #{tpu_custom_call.1} parent=11 // pred_fallthru
          _
        // Predicated region
        $region21: #{tpu_custom_call.1} parent=11 // pred_check
          %p285 = pneg %p89
        $region22: #{tpu_custom_call.1} parent=11 // pred_check_branch
          %287 = sbr.rel (%p285) target = $region24
        $region23: #{tpu_custom_call.1} parent=11 // pred_region
          _
        $region24: #{tpu_custom_call.1} parent=11 // pred_fallthru
          _
        // Predicated region
        $region25: #{tpu_custom_call.1} parent=11 // pred_check
          %p288 = pneg %p110
        $region26: #{tpu_custom_call.1} parent=11 // pred_check_branch
          %290 = sbr.rel (%p288) target = $region28
        $region27: #{tpu_custom_call.1} parent=11 // pred_region
          _
        $region28: #{tpu_custom_call.1} parent=11 // pred_fallthru
          _
        // Predicated region
        $region29: #{tpu_custom_call.1} parent=11 // pred_check
          %p291 = pneg %p131
        $region30: #{tpu_custom_call.1} parent=11 // pred_check_branch
          %293 = sbr.rel (%p291) target = $region32
        $region31: #{tpu_custom_call.1} parent=11 // pred_region
          _
        $region32: #{tpu_custom_call.1} parent=11 // pred_fallthru
          _
        // Predicated region
        $region33: #{tpu_custom_call.1} parent=11 // pred_check
          %p294 = pneg %p152
        $region34: #{tpu_custom_call.1} parent=11 // pred_check_branch
          %296 = sbr.rel (%p294) target = $region36
        $region35: #{tpu_custom_call.1} parent=11 // pred_region
          _
        $region36: #{tpu_custom_call.1} parent=11 // pred_fallthru
          _
      $region12: #{tpu_custom_call.1} parent=5 // pred_fallthru
        _
      %p297 = scmp.lt.s32.totalorder %s26, 2
      // Predicated region
      $region37: #{tpu_custom_call.1} parent=5 // pred_check
        %p298 = pneg %p297
      $region38: #{tpu_custom_call.1} parent=5 // pred_check_branch
        %300 = sbr.rel (%p298) target = $region40
      $region39: #{tpu_custom_call.1} parent=5 // pred_region
        // Predicated region
        $region41: #{tpu_custom_call.1} parent=39 // pred_check
          %p301 = pneg %p172
        $region42: #{tpu_custom_call.1} parent=39 // pred_check_branch
          %303 = sbr.rel (%p301) target = $region44
        $region43: #{tpu_custom_call.1} parent=39 // pred_region
          %p304 = scmp.lt.s32.totalorder %s26, 1
          %s305 = scalar_select %p304, %s26, 1
          %s306 = smul.addr %s305, 8
          %s307 = smul.addr %s306, 8
          %s308 = scalar_lea.vmem %s6, %s307
        $region44: #{tpu_custom_call.1} parent=39 // pred_fallthru
          _
        // Predicated region
        $region45: #{tpu_custom_call.1} parent=39 // pred_check
          %p309 = pneg %p198
        $region46: #{tpu_custom_call.1} parent=39 // pred_check_branch
          %311 = sbr.rel (%p309) target = $region48
        $region47: #{tpu_custom_call.1} parent=39 // pred_region
          %s312 = sand.u32 %s188, 1
          %s313 = scalar_lea.sflag [#allocation3], %s312
          %s314 = sand.u32 %s188, 1
          %s315 = smul.addr %s314, 64
          %s316 = scalar_lea.vmem [#allocation6], %s315
          %s318 = ssub.s32 1024, 1024
          %319 = vsyncadd %s313, %s318
          %s320 = smul.addr %s26, 8
          %s321 = smul.addr %s320, 128
          %s322 = scalar_lea.hbm %s7, %s321
          %s323 = sshll.u32 %s316, 4
          %s324 = int_to_ptr.vmem [resolvable:$true] %s323
          %329 = dma.hbm_to_vmem [thread:$0]  %s322, 1024, %s324, %s313, 256, 256, 16
        $region48: #{tpu_custom_call.1} parent=39 // pred_fallthru
          _
      $region40: #{tpu_custom_call.1} parent=5 // pred_fallthru
        _
      %p330 = scmp.le.s32.totalorder 1, %s26
      %p331 = scmp.lt.s32.totalorder %s26, 3
      %p332 = pnand %p330, %p331
      %p333 = pneg %p332
      // Predicated region
      $region49: #{tpu_custom_call.1} parent=5 // pred_check
        _
      $region50: #{tpu_custom_call.1} parent=5 // pred_check_branch
        %335 = sbr.rel (%p332) target = $region52
      $region51: #{tpu_custom_call.1} parent=5 // pred_region
        %s336 = ssub.s32 %s26, 1
        // Predicated region
        $region53: #{tpu_custom_call.1} parent=51 // pred_check
          %p337 = pneg %p68
        $region54: #{tpu_custom_call.1} parent=51 // pred_check_branch
          %339 = sbr.rel (%p337) target = $region56
        $region55: #{tpu_custom_call.1} parent=51 // pred_region
          %340 = dma.done [#allocation5], 128
        $region56: #{tpu_custom_call.1} parent=51 // pred_fallthru
          _
        %s341 = sand.u32 %s191, 1
        %s342 = scalar_lea.sflag [#allocation3], %s341
        %s343 = sand.u32 %s191, 1
        %s344 = smul.addr %s343, 64
        %s345 = scalar_lea.vmem [#allocation6], %s344
        // Predicated region
        $region57: #{tpu_custom_call.1} parent=51 // pred_check
          %p346 = pneg %p204
        $region58: #{tpu_custom_call.1} parent=51 // pred_check_branch
          %348 = sbr.rel (%p346) target = $region60
        $region59: #{tpu_custom_call.1} parent=51 // pred_region
          %349 = dma.done %s342, 1024
        $region60: #{tpu_custom_call.1} parent=51 // pred_fallthru
          _
        %350 = sfence
        %p351 = pneg %p47
        %p352 = pneg %p44
        %p353 = pneg %p68
        %p354 = pneg %p65
        %p355 = pneg %p89
        %p356 = pneg %p86
        %p357 = pneg %p110
        %p358 = pneg %p107
        %p359 = pneg %p131
        %p360 = pneg %p128
        %p361 = pneg %p152
        %p362 = pneg %p149
        %p363 = scmp.lt.s32.totalorder %s31, 1
        %s364 = scalar_select %p363, %s31, 1
        %s365 = smul.addr %s364, 8
        %s366 = smul.addr %s365, 8
        %s367 = scalar_lea.vmem %s6, %s366
        %p368 = pneg %p178
        %p369 = pneg %p175
        %s370 = sand.u32 %s191, 1
        %s371 = scalar_lea.sflag [#allocation3], %s370
        %s372 = sand.u32 %s191, 1
        %s373 = smul.addr %s372, 64
        %s374 = scalar_lea.vmem [#allocation6], %s373
        %p375 = pneg %p204
        %p376 = pneg %p201
        %p377 = pneg %p230
        %p378 = pneg %p227
        %s379 = sand.u32 %s217, 1
        %s380 = scalar_lea.sflag [#allocation4], %s379
        %s381 = sand.u32 %s217, 1
        %s382 = smul.addr %s381, 64
        %s383 = scalar_lea.vmem [#allocation7], %s382
        %p384 = pneg %p256
        %p385 = pneg %p253
        %s386 = sand.u32 %s243, 1
        %s387 = scalar_lea.sflag [#allocation9], %s386
        %s388 = sand.u32 %s243, 1
        %s389 = smul.addr %s388, 64
        %s390 = scalar_lea.vmem [#allocation8], %s389
        %p391 = scmp.lt.s32.totalorder %s31, 1
        %s392 = scalar_select %p391, %s31, 1
        %s393 = smul.addr %s392, 8
        %s394 = smul.addr %s393, 8
        %s395 = scalar_lea.vmem %s6, %s394
        %v396 = vld [vmem:[%s395] sm:$0xff]
        %v397 = vld [vmem:[%s395 + $0x8] sm:$0xff]
        %v398 = vld [vmem:[%s395 + $0x10] sm:$0xff]
        %v399 = vld [vmem:[%s395 + $0x18] sm:$0xff]
        %v400 = vld [vmem:[%s395 + $0x20] sm:$0xff]
        %v401 = vld [vmem:[%s395 + $0x28] sm:$0xff]
        %v402 = vld [vmem:[%s395 + $0x30] sm:$0xff]
        %v403 = vld [vmem:[%s395 + $0x38] sm:$0xff]
        %v404 = vld [vmem:[%s345] sm:$0xff]
        %v405 = vld [vmem:[%s345 + $0x8] sm:$0xff]
        %v406 = vld [vmem:[%s345 + $0x10] sm:$0xff]
        %v407 = vld [vmem:[%s345 + $0x18] sm:$0xff]
        %v408 = vld [vmem:[%s345 + $0x20] sm:$0xff]
        %v409 = vld [vmem:[%s345 + $0x28] sm:$0xff]
        %v410 = vld [vmem:[%s345 + $0x30] sm:$0xff]
        %v411 = vld [vmem:[%s345 + $0x38] sm:$0xff]
        %v412 = vmul.f32 %v396, %v404
        %v413 = vmul.f32 %v397, %v405
        %v414 = vmul.f32 %v398, %v406
        %v415 = vmul.f32 %v399, %v407
        %v416 = vmul.f32 %v400, %v408
        %v417 = vmul.f32 %v401, %v409
        %v418 = vmul.f32 %v402, %v410
        %v419 = vmul.f32 %v403, %v411
        %v420 = vmax.f32 %v412, %v416
        %v421 = vmax.f32 %v414, %v418
        %v422 = vmax.f32 %v420, %v421
        %v423 = vrot.slane %v422, 4
        %v424 = vmax.f32 %v422, %v423
        %v425 = vrot.slane %v424, 2
        %v426 = vmax.f32 %v424, %v425
        %v427 = vrot.slane %v426, 1
        %v428 = vmax.f32 %v426, %v427
        %v429 = vmax.f32 %v413, %v417
        %v430 = vmax.f32 %v415, %v419
        %v431 = vmax.f32 %v429, %v430
        %v432 = vrot.slane %v431, 4
        %v433 = vmax.f32 %v431, %v432
        %v434 = vrot.slane %v433, 2
        %v435 = vmax.f32 %v433, %v434
        %v436 = vrot.slane %v435, 1
        %v437 = vmax.f32 %v435, %v436
        %v438 = vld [vmem:[%s0] sm:$0x3]
        %441 = vrot.lane.b32.xlu0 %v428, 3
        %v442 = vpop.permute.xlu0 %441
        %443 = vrot.lane.b32.xlu0 %v437, 3
        %v444 = vpop.permute.xlu0 %443
        %vm445 = vcmask 23552
        %v446 = vsel %vm445, %v442, %v444
        %v448 = vsel %vm445, 0.0, %v442
        %v449 = vadd.s32 %v438, 4294967293
        %vm450 = vcmp.ge.s32.totalorder %v449, 0
        %vm451 = vcmp.lt.s32.totalorder %v449, 16
        %vm452 = vmand %vm450, %vm451
        %v454 = vcombine.low %v448, %v446
        %v456 = vunpack.c.l.s4 1966171168
        %v457 = vunpack.c.0.s8 %v456
        %v458 = vlaneseq
        %v459 = vshrl.u32 %v458, 7
        %v460 = vsub.s32 %v457, %v459
        %v461 = vrot.slane %v454, %v460
        %v463 = vunpack.c.l.s4 1966171168
        %v464 = vunpack.c.0.s8 %v463
        %v465 = vlaneseq
        %v466 = vshrl.u32 %v465, 7
        %v467 = vsub.s32 %v464, %v466
        %v468 = vrot.slane %v461, %v467
        %v470 = vsel %vm452, %v468, 0.0
        %471 = vrot.lane.b32.xlu0 %v428, 2
        %v472 = vpop.permute.xlu0 %471
        %473 = vrot.lane.b32.xlu0 %v437, 2
        %v474 = vpop.permute.xlu0 %473
        %vm475 = vcmask 15360
        %v476 = vsel %vm475, %v472, %v474
        %v478 = vsel %vm475, 0.0, %v472
        %v479 = vadd.s32 %v438, 4294967294
        %vm480 = vcmp.ge.s32.totalorder %v479, 0
        %vm481 = vcmp.lt.s32.totalorder %v479, 16
        %vm482 = vmand %vm480, %vm481
        %v484 = vcombine.low %v478, %v476
        %v486 = vunpack.c.l.s4 1966171168
        %v487 = vunpack.c.0.s8 %v486
        %v488 = vlaneseq
        %v489 = vshrl.u32 %v488, 7
        %v490 = vsub.s32 %v487, %v489
        %v491 = vrot.slane %v484, %v490
        %v493 = vunpack.c.l.s4 1966171168
        %v494 = vunpack.c.0.s8 %v493
        %v495 = vlaneseq
        %v496 = vshrl.u32 %v495, 7
        %v497 = vsub.s32 %v494, %v496
        %v498 = vrot.slane %v491, %v497
        %v500 = vsel %vm482, %v498, 0.0
        %501 = vrot.lane.b32.xlu0 %v428, 1
        %v502 = vpop.permute.xlu0 %501
        %503 = vrot.lane.b32.xlu0 %v437, 1
        %v504 = vpop.permute.xlu0 %503
        %vm505 = vcmask 7168
        %v506 = vsel %vm505, %v502, %v504
        %v508 = vsel %vm505, 0.0, %v502
        %v509 = vadd.s32 %v438, 4294967295
        %vm510 = vcmp.ge.s32.totalorder %v509, 0
        %vm511 = vcmp.lt.s32.totalorder %v509, 16
        %vm512 = vmand %vm510, %vm511
        %v514 = vcombine.low %v508, %v506
        %v516 = vunpack.c.l.s4 1966171168
        %v517 = vunpack.c.0.s8 %v516
        %v518 = vlaneseq
        %v519 = vshrl.u32 %v518, 7
        %v520 = vsub.s32 %v517, %v519
        %v521 = vrot.slane %v514, %v520
        %v523 = vunpack.c.l.s4 1966171168
        %v524 = vunpack.c.0.s8 %v523
        %v525 = vlaneseq
        %v526 = vshrl.u32 %v525, 7
        %v527 = vsub.s32 %v524, %v526
        %v528 = vrot.slane %v521, %v527
        %v530 = vsel %vm512, %v528, 0.0
        %vm531 = vcmp.ge.s32.totalorder %v438, 0
        %vm532 = vcmp.lt.s32.totalorder %v438, 16
        %vm533 = vmand %vm531, %vm532
        %v534 = vcombine.low %v428, %v437
        %v536 = vunpack.c.l.s4 1966171168
        %v537 = vunpack.c.0.s8 %v536
        %v538 = vlaneseq
        %v539 = vshrl.u32 %v538, 7
        %v540 = vsub.s32 %v537, %v539
        %v541 = vrot.slane %v534, %v540
        %v543 = vunpack.c.l.s4 1966171168
        %v544 = vunpack.c.0.s8 %v543
        %v545 = vlaneseq
        %v546 = vshrl.u32 %v545, 7
        %v547 = vsub.s32 %v544, %v546
        %v548 = vrot.slane %v541, %v547
        %v550 = vsel %vm533, %v548, 0.0
        %551 = vrot.lane.b32.xlu0 %v428, 127
        %v552 = vpop.permute.xlu0 %551
        %553 = vrot.lane.b32.xlu0 %v437, 127
        %v554 = vpop.permute.xlu0 %553
        %vm555 = vcmask 1039360
        %v556 = vsel %vm555, %v552, %v554
        %v558 = vsel %vm555, %v554, 0.0
        %v559 = vadd.s32 %v438, 1
        %vm560 = vcmp.ge.s32.totalorder %v559, 0
        %vm561 = vcmp.lt.s32.totalorder %v559, 16
        %vm562 = vmand %vm560, %vm561
        %v564 = vcombine.low %v556, %v558
        %v566 = vunpack.c.l.s4 1966171168
        %v567 = vunpack.c.0.s8 %v566
        %v568 = vlaneseq
        %v569 = vshrl.u32 %v568, 7
        %v570 = vsub.s32 %v567, %v569
        %v571 = vrot.slane %v564, %v570
        %v573 = vunpack.c.l.s4 1966171168
        %v574 = vunpack.c.0.s8 %v573
        %v575 = vlaneseq
        %v576 = vshrl.u32 %v575, 7
        %v577 = vsub.s32 %v574, %v576
        %v578 = vrot.slane %v571, %v577
        %v580 = vsel %vm562, %v578, 0.0
        %581 = vrot.lane.b32.xlu0 %v428, 126
        %v582 = vpop.permute.xlu0 %581
        %583 = vrot.lane.b32.xlu0 %v437, 126
        %v584 = vpop.permute.xlu0 %583
        %vm585 = vcmask 1031168
        %v586 = vsel %vm585, %v582, %v584
        %v588 = vsel %vm585, %v584, 0.0
        %v589 = vadd.s32 %v438, 2
        %vm590 = vcmp.ge.s32.totalorder %v589, 0
        %vm591 = vcmp.lt.s32.totalorder %v589, 16
        %vm592 = vmand %vm590, %vm591
        %v594 = vcombine.low %v586, %v588
        %v596 = vunpack.c.l.s4 1966171168
        %v597 = vunpack.c.0.s8 %v596
        %v598 = vlaneseq
        %v599 = vshrl.u32 %v598, 7
        %v600 = vsub.s32 %v597, %v599
        %v601 = vrot.slane %v594, %v600
        %v603 = vunpack.c.l.s4 1966171168
        %v604 = vunpack.c.0.s8 %v603
        %v605 = vlaneseq
        %v606 = vshrl.u32 %v605, 7
        %v607 = vsub.s32 %v604, %v606
        %v608 = vrot.slane %v601, %v607
        %v610 = vsel %vm592, %v608, 0.0
        %611 = vrot.lane.b32.xlu0 %v428, 125
        %v612 = vpop.permute.xlu0 %611
        %613 = vrot.lane.b32.xlu0 %v437, 125
        %v614 = vpop.permute.xlu0 %613
        %vm615 = vcmask 1022976
        %v616 = vsel %vm615, %v612, %v614
        %v618 = vsel %vm615, %v614, 0.0
        %v619 = vadd.s32 %v438, 3
        %vm620 = vcmp.ge.s32.totalorder %v619, 0
        %vm621 = vcmp.lt.s32.totalorder %v619, 16
        %vm622 = vmand %vm620, %vm621
        %v624 = vcombine.low %v616, %v618
        %v626 = vunpack.c.l.s4 1966171168
        %v627 = vunpack.c.0.s8 %v626
        %v628 = vlaneseq
        %v629 = vshrl.u32 %v628, 7
        %v630 = vsub.s32 %v627, %v629
        %v631 = vrot.slane %v624, %v630
        %v633 = vunpack.c.l.s4 1966171168
        %v634 = vunpack.c.0.s8 %v633
        %v635 = vlaneseq
        %v636 = vshrl.u32 %v635, 7
        %v637 = vsub.s32 %v634, %v636
        %v638 = vrot.slane %v631, %v637
        %v640 = vsel %vm622, %v638, 0.0
        %s641 = sld [smem:[#allocation2]]
        %v642 = vstv %s641
        %v643 = vmul.f32 %v470, %v642
        %s644 = sld [smem:[#allocation2 + $0x1]]
        %v645 = vstv %s644
        %v646 = vmul.f32 %v500, %v645
        %v647 = vadd.f32 %v643, %v646
        %s648 = sld [smem:[#allocation2 + $0x2]]
        %v649 = vstv %s648
        %v650 = vmul.f32 %v530, %v649
        %v651 = vadd.f32 %v647, %v650
        %s652 = sld [smem:[#allocation2 + $0x3]]
        %v653 = vstv %s652
        %v654 = vmul.f32 %v550, %v653
        %v655 = vadd.f32 %v651, %v654
        %s656 = sld [smem:[#allocation2 + $0x4]]
        %v657 = vstv %s656
        %v658 = vmul.f32 %v580, %v657
        %v659 = vadd.f32 %v655, %v658
        %s660 = sld [smem:[#allocation2 + $0x5]]
        %v661 = vstv %s660
        %v662 = vmul.f32 %v610, %v661
        %v663 = vadd.f32 %v659, %v662
        %s664 = sld [smem:[#allocation2 + $0x6]]
        %v665 = vstv %s664
        %v666 = vmul.f32 %v640, %v665
        %v667 = vadd.f32 %v663, %v666
        %v669 = vlaneseq
        %v670 = vshrl.u32 %v669, 7
        %v671 = vsub.s32 0, %v670
        %v672 = vrot.slane %v667, %v671
        %v673 = vlaneseq
        %v674 = vshrl.u32 %v673, 7
        %v675 = vsub.s32 1, %v674
        %v676 = vrot.slane %v667, %v675
        %677 = vrot.lane.b32.xlu0 %v672, 48
        %v678 = vpop.permute.xlu0 %677
        %679 = vrot.lane.b32.xlu0 %v676, 48
        %v680 = vpop.permute.xlu0 %679
        %vm681 = vcmask 392192
        %v682 = vsel %vm681, %v678, %v680
        %v685 = vsel %vm681, 0.0, %v678
        %v686 = vadd.f32 %v685, 0.0
        %v687 = vadd.f32 %v682, 0.0
        %s688 = sld [smem:[#allocation2 + $0x80]]
        %v689 = vstv %s688
        %v690 = vmul.f32 %v470, %v689
        %s691 = sld [smem:[#allocation2 + $0x81]]
        %v692 = vstv %s691
        %v693 = vmul.f32 %v500, %v692
        %v694 = vadd.f32 %v690, %v693
        %s695 = sld [smem:[#allocation2 + $0x82]]
        %v696 = vstv %s695
        %v697 = vmul.f32 %v530, %v696
        %v698 = vadd.f32 %v694, %v697
        %s699 = sld [smem:[#allocation2 + $0x83]]
        %v700 = vstv %s699
        %v701 = vmul.f32 %v550, %v700
        %v702 = vadd.f32 %v698, %v701
        %s703 = sld [smem:[#allocation2 + $0x84]]
        %v704 = vstv %s703
        %v705 = vmul.f32 %v580, %v704
        %v706 = vadd.f32 %v702, %v705
        %s707 = sld [smem:[#allocation2 + $0x85]]
        %v708 = vstv %s707
        %v709 = vmul.f32 %v610, %v708
        %v710 = vadd.f32 %v706, %v709
        %s711 = sld [smem:[#allocation2 + $0x86]]
        %v712 = vstv %s711
        %v713 = vmul.f32 %v640, %v712
        %v714 = vadd.f32 %v710, %v713
        %v716 = vlaneseq
        %v717 = vshrl.u32 %v716, 7
        %v718 = vsub.s32 0, %v717
        %v719 = vrot.slane %v714, %v718
        %v720 = vlaneseq
        %v721 = vshrl.u32 %v720, 7
        %v722 = vsub.s32 1, %v721
        %v723 = vrot.slane %v714, %v722
        %724 = vrot.lane.b32.xlu0 %v719, 32
        %v725 = vpop.permute.xlu0 %724
        %726 = vrot.lane.b32.xlu0 %v723, 32
        %v727 = vpop.permute.xlu0 %726
        %vm728 = vcmask 261120
        %v729 = vsel %vm728, %v725, %v727
        %v732 = vsel %vm728, 0.0, %v725
        %v733 = vadd.f32 %v686, %v732
        %v734 = vadd.f32 %v687, %v729
        %s735 = sld [smem:[#allocation2 + $0x100]]
        %v736 = vstv %s735
        %v737 = vmul.f32 %v470, %v736
        %s738 = sld [smem:[#allocation2 + $0x101]]
        %v739 = vstv %s738
        %v740 = vmul.f32 %v500, %v739
        %v741 = vadd.f32 %v737, %v740
        %s742 = sld [smem:[#allocation2 + $0x102]]
        %v743 = vstv %s742
        %v744 = vmul.f32 %v530, %v743
        %v745 = vadd.f32 %v741, %v744
        %s746 = sld [smem:[#allocation2 + $0x103]]
        %v747 = vstv %s746
        %v748 = vmul.f32 %v550, %v747
        %v749 = vadd.f32 %v745, %v748
        %s750 = sld [smem:[#allocation2 + $0x104]]
        %v751 = vstv %s750
        %v752 = vmul.f32 %v580, %v751
        %v753 = vadd.f32 %v749, %v752
        %s754 = sld [smem:[#allocation2 + $0x105]]
        %v755 = vstv %s754
        %v756 = vmul.f32 %v610, %v755
        %v757 = vadd.f32 %v753, %v756
        %s758 = sld [smem:[#allocation2 + $0x106]]
        %v759 = vstv %s758
        %v760 = vmul.f32 %v640, %v759
        %v761 = vadd.f32 %v757, %v760
        %v763 = vlaneseq
        %v764 = vshrl.u32 %v763, 7
        %v765 = vsub.s32 0, %v764
        %v766 = vrot.slane %v761, %v765
        %v767 = vlaneseq
        %v768 = vshrl.u32 %v767, 7
        %v769 = vsub.s32 1, %v768
        %v770 = vrot.slane %v761, %v769
        %771 = vrot.lane.b32.xlu0 %v766, 16
        %v772 = vpop.permute.xlu0 %771
        %773 = vrot.lane.b32.xlu0 %v770, 16
        %v774 = vpop.permute.xlu0 %773
        %vm775 = vcmask 130048
        %v776 = vsel %vm775, %v772, %v774
        %v779 = vsel %vm775, 0.0, %v772
        %v780 = vadd.f32 %v733, %v779
        %v781 = vadd.f32 %v734, %v776
        %s782 = sld [smem:[#allocation2 + $0x180]]
        %v783 = vstv %s782
        %v784 = vmul.f32 %v470, %v783
        %s785 = sld [smem:[#allocation2 + $0x181]]
        %v786 = vstv %s785
        %v787 = vmul.f32 %v500, %v786
        %v788 = vadd.f32 %v784, %v787
        %s789 = sld [smem:[#allocation2 + $0x182]]
        %v790 = vstv %s789
        %v791 = vmul.f32 %v530, %v790
        %v792 = vadd.f32 %v788, %v791
        %s793 = sld [smem:[#allocation2 + $0x183]]
        %v794 = vstv %s793
        %v795 = vmul.f32 %v550, %v794
        %v796 = vadd.f32 %v792, %v795
        %s797 = sld [smem:[#allocation2 + $0x184]]
        %v798 = vstv %s797
        %v799 = vmul.f32 %v580, %v798
        %v800 = vadd.f32 %v796, %v799
        %s801 = sld [smem:[#allocation2 + $0x185]]
        %v802 = vstv %s801
        %v803 = vmul.f32 %v610, %v802
        %v804 = vadd.f32 %v800, %v803
        %s805 = sld [smem:[#allocation2 + $0x186]]
        %v806 = vstv %s805
        %v807 = vmul.f32 %v640, %v806
        %v808 = vadd.f32 %v804, %v807
        %v810 = vlaneseq
        %v811 = vshrl.u32 %v810, 7
        %v812 = vsub.s32 0, %v811
        %v813 = vrot.slane %v808, %v812
        %v814 = vlaneseq
        %v815 = vshrl.u32 %v814, 7
        %v816 = vsub.s32 1, %v815
        %v817 = vrot.slane %v808, %v816
        %v820 = vadd.f32 %v780, %v813
        %v821 = vadd.f32 %v781, %v817
        %s822 = sld [smem:[#allocation2 + $0x200]]
        %v823 = vstv %s822
        %v824 = vmul.f32 %v470, %v823
        %s825 = sld [smem:[#allocation2 + $0x201]]
        %v826 = vstv %s825
        %v827 = vmul.f32 %v500, %v826
        %v828 = vadd.f32 %v824, %v827
        %s829 = sld [smem:[#allocation2 + $0x202]]
        %v830 = vstv %s829
        %v831 = vmul.f32 %v530, %v830
        %v832 = vadd.f32 %v828, %v831
        %s833 = sld [smem:[#allocation2 + $0x203]]
        %v834 = vstv %s833
        %v835 = vmul.f32 %v550, %v834
        %v836 = vadd.f32 %v832, %v835
        %s837 = sld [smem:[#allocation2 + $0x204]]
        %v838 = vstv %s837
        %v839 = vmul.f32 %v580, %v838
        %v840 = vadd.f32 %v836, %v839
        %s841 = sld [smem:[#allocation2 + $0x205]]
        %v842 = vstv %s841
        %v843 = vmul.f32 %v610, %v842
        %v844 = vadd.f32 %v840, %v843
        %s845 = sld [smem:[#allocation2 + $0x206]]
        %v846 = vstv %s845
        %v847 = vmul.f32 %v640, %v846
        %v848 = vadd.f32 %v844, %v847
        %v850 = vlaneseq
        %v851 = vshrl.u32 %v850, 7
        %v852 = vsub.s32 0, %v851
        %v853 = vrot.slane %v848, %v852
        %v854 = vlaneseq
        %v855 = vshrl.u32 %v854, 7
        %v856 = vsub.s32 1, %v855
        %v857 = vrot.slane %v848, %v856
        %858 = vrot.lane.b32.xlu0 %v853, 112
        %v859 = vpop.permute.xlu0 %858
        %860 = vrot.lane.b32.xlu0 %v857, 112
        %v861 = vpop.permute.xlu0 %860
        %vm862 = vcmask 916480
        %v863 = vsel %vm862, %v859, %v861
        %v866 = vsel %vm862, %v861, 0.0
        %v867 = vadd.f32 %v820, %v863
        %v868 = vadd.f32 %v821, %v866
        %s869 = sld [smem:[#allocation2 + $0x280]]
        %v870 = vstv %s869
        %v871 = vmul.f32 %v470, %v870
        %s872 = sld [smem:[#allocation2 + $0x281]]
        %v873 = vstv %s872
        %v874 = vmul.f32 %v500, %v873
        %v875 = vadd.f32 %v871, %v874
        %s876 = sld [smem:[#allocation2 + $0x282]]
        %v877 = vstv %s876
        %v878 = vmul.f32 %v530, %v877
        %v879 = vadd.f32 %v875, %v878
        %s880 = sld [smem:[#allocation2 + $0x283]]
        %v881 = vstv %s880
        %v882 = vmul.f32 %v550, %v881
        %v883 = vadd.f32 %v879, %v882
        %s884 = sld [smem:[#allocation2 + $0x284]]
        %v885 = vstv %s884
        %v886 = vmul.f32 %v580, %v885
        %v887 = vadd.f32 %v883, %v886
        %s888 = sld [smem:[#allocation2 + $0x285]]
        %v889 = vstv %s888
        %v890 = vmul.f32 %v610, %v889
        %v891 = vadd.f32 %v887, %v890
        %s892 = sld [smem:[#allocation2 + $0x286]]
        %v893 = vstv %s892
        %v894 = vmul.f32 %v640, %v893
        %v895 = vadd.f32 %v891, %v894
        %v897 = vlaneseq
        %v898 = vshrl.u32 %v897, 7
        %v899 = vsub.s32 0, %v898
        %v900 = vrot.slane %v895, %v899
        %v901 = vlaneseq
        %v902 = vshrl.u32 %v901, 7
        %v903 = vsub.s32 1, %v902
        %v904 = vrot.slane %v895, %v903
        %905 = vrot.lane.b32.xlu0 %v900, 96
        %v906 = vpop.permute.xlu0 %905
        %907 = vrot.lane.b32.xlu0 %v904, 96
        %v908 = vpop.permute.xlu0 %907
        %vm909 = vcmask 785408
        %v910 = vsel %vm909, %v906, %v908
        %v913 = vsel %vm909, %v908, 0.0
        %v914 = vadd.f32 %v867, %v910
        %v915 = vadd.f32 %v868, %v913
        %s916 = sld [smem:[#allocation2 + $0x300]]
        %v917 = vstv %s916
        %v918 = vmul.f32 %v470, %v917
        %s919 = sld [smem:[#allocation2 + $0x301]]
        %v920 = vstv %s919
        %v921 = vmul.f32 %v500, %v920
        %v922 = vadd.f32 %v918, %v921
        %s923 = sld [smem:[#allocation2 + $0x302]]
        %v924 = vstv %s923
        %v925 = vmul.f32 %v530, %v924
        %v926 = vadd.f32 %v922, %v925
        %s927 = sld [smem:[#allocation2 + $0x303]]
        %v928 = vstv %s927
        %v929 = vmul.f32 %v550, %v928
        %v930 = vadd.f32 %v926, %v929
        %s931 = sld [smem:[#allocation2 + $0x304]]
        %v932 = vstv %s931
        %v933 = vmul.f32 %v580, %v932
        %v934 = vadd.f32 %v930, %v933
        %s935 = sld [smem:[#allocation2 + $0x305]]
        %v936 = vstv %s935
        %v937 = vmul.f32 %v610, %v936
        %v938 = vadd.f32 %v934, %v937
        %s939 = sld [smem:[#allocation2 + $0x306]]
        %v940 = vstv %s939
        %v941 = vmul.f32 %v640, %v940
        %v942 = vadd.f32 %v938, %v941
        %v944 = vlaneseq
        %v945 = vshrl.u32 %v944, 7
        %v946 = vsub.s32 0, %v945
        %v947 = vrot.slane %v942, %v946
        %v948 = vlaneseq
        %v949 = vshrl.u32 %v948, 7
        %v950 = vsub.s32 1, %v949
        %v951 = vrot.slane %v942, %v950
        %952 = vrot.lane.b32.xlu0 %v947, 80
        %v953 = vpop.permute.xlu0 %952
        %954 = vrot.lane.b32.xlu0 %v951, 80
        %v955 = vpop.permute.xlu0 %954
        %vm956 = vcmask 654336
        %v957 = vsel %vm956, %v953, %v955
        %v960 = vsel %vm956, %v955, 0.0
        %v961 = vadd.f32 %v914, %v957
        %v962 = vadd.f32 %v915, %v960
        %v963 = vxor.u32 %v961, 2147483648
        %v964 = vxor.u32 %v962, 2147483648
        %v965 = vmul.f32 %v963, 1.442695
        %v966 = vpow.pop %v965
        %v967 = vmul.f32 %v964, 1.442695
        %v968 = vpow.pop %v967
        %v969 = vadd.f32 %v966, 1.0
        %v970 = vadd.f32 %v968, 1.0
        %v971 = vrcp.pop %v969
        %v972 = vmul.f32 1.0, %v971
        %v973 = vrcp.pop %v970
        %v974 = vmul.f32 1.0, %v973
        %v975 = vlaneseq
        %v976 = vshrl.u32 %v975, 7
        %v977 = vsub.s32 0, %v976
        %v978 = vrot.slane %v972, %v977
        %v979 = vlaneseq
        %v980 = vshrl.u32 %v979, 7
        %v981 = vsub.s32 0, %v980
        %v982 = vrot.slane %v974, %v981
        %v983 = vmul.f32 %v396, %v978
        %v984 = vmul.f32 %v397, %v982
        %v985 = vmul.f32 %v398, %v978
        %v986 = vmul.f32 %v399, %v982
        %v987 = vmul.f32 %v400, %v978
        %v988 = vmul.f32 %v401, %v982
        %v989 = vmul.f32 %v402, %v978
        %v990 = vmul.f32 %v403, %v982
        %v991 = vmul.f32 %v404, %v978
        %v992 = vmul.f32 %v405, %v982
        %v993 = vmul.f32 %v406, %v978
        %v994 = vmul.f32 %v407, %v982
        %v995 = vmul.f32 %v408, %v978
        %v996 = vmul.f32 %v409, %v982
        %v997 = vmul.f32 %v410, %v978
        %v998 = vmul.f32 %v411, %v982
        %v999 = vmax.f32 %v983, %v984
        %1000 = vmax.xlane.f32.xlu0 %v999
        %v1001 = vpop.xlane.xlu0 %1000
        %v1002 = vmax.f32 %v985, %v986
        %1003 = vmax.xlane.f32.xlu0 %v1002
        %v1004 = vpop.xlane.xlu0 %1003
        %v1005 = vmax.f32 %v987, %v988
        %1006 = vmax.xlane.f32.xlu0 %v1005
        %v1007 = vpop.xlane.xlu0 %1006
        %v1008 = vmax.f32 %v989, %v990
        %1009 = vmax.xlane.f32.xlu0 %v1008
        %v1010 = vpop.xlane.xlu0 %1009
        %v1011 = vld [vmem:[%s2] sm:$0xff]
        %v1012 = vld [vmem:[%s2 + $0x8] sm:$0xff]
        %v1013 = vld [vmem:[%s2 + $0x10] sm:$0xff]
        %v1014 = vld [vmem:[%s2 + $0x18] sm:$0xff]
        %v1015 = vmul.f32 %v1011, %v1001
        %v1016 = vmul.f32 %v1012, %v1004
        %v1017 = vmul.f32 %v1013, %v1007
        %v1018 = vmul.f32 %v1014, %v1010
        %v1019 = vsel %vm475, %v1015, 0.0
        %v1020 = vsel %vm475, %v1016, 0.0
        %v1021 = vadd.f32 %v1019, %v1020
        %v1022 = vsel %vm475, %v1017, 0.0
        %v1023 = vadd.f32 %v1021, %v1022
        %v1024 = vsel %vm475, %v1018, 0.0
        %v1025 = vadd.f32 %v1023, %v1024
        %v1026 = vrot.slane %v1025, 4
        %v1027 = vadd.f32 %v1025, %v1026
        %v1028 = vrot.slane %v1027, 2
        %v1029 = vadd.f32 %v1027, %v1028
        %v1030 = vrot.slane %v1029, 1
        %v1031 = vadd.f32 %v1029, %v1030
        %v1032 = vmax.f32 %v1031, 0.0
        %v1033 = vld [vmem:[%s3] sm:$0xff]
        %v1034 = vld [vmem:[%s3 + $0x8] sm:$0xff]
        %v1035 = vld [vmem:[%s3 + $0x10] sm:$0xff]
        %v1036 = vld [vmem:[%s3 + $0x18] sm:$0xff]
        %v1037 = vmul.f32 %v1033, %v1032
        %v1038 = vmul.f32 %v1034, %v1032
        %v1039 = vmul.f32 %v1035, %v1032
        %v1040 = vmul.f32 %v1036, %v1032
        %v1041 = vsel %vm475, %v1037, 0.0
        %1042 = vadd.xlane.f32.xlu0 %v1041
        %v1043 = vpop.xlane.xlu0 %1042
        %v1044 = vsel %vm475, %v1038, 0.0
        %1045 = vadd.xlane.f32.xlu0 %v1044
        %v1046 = vpop.xlane.xlu0 %1045
        %v1047 = vsel %vm475, %v1039, 0.0
        %1048 = vadd.xlane.f32.xlu0 %v1047
        %v1049 = vpop.xlane.xlu0 %1048
        %v1050 = vsel %vm475, %v1040, 0.0
        %1051 = vadd.xlane.f32.xlu0 %v1050
        %v1052 = vpop.xlane.xlu0 %1051
        %v1053 = vxor.u32 %v1043, 2147483648
        %v1054 = vxor.u32 %v1046, 2147483648
        %v1055 = vxor.u32 %v1049, 2147483648
        %v1056 = vxor.u32 %v1052, 2147483648
        %v1057 = vmul.f32 %v1053, 1.442695
        %v1058 = vpow.pop %v1057
        %v1059 = vmul.f32 %v1054, 1.442695
        %v1060 = vpow.pop %v1059
        %v1061 = vmul.f32 %v1055, 1.442695
        %v1062 = vpow.pop %v1061
        %v1063 = vmul.f32 %v1056, 1.442695
        %v1064 = vpow.pop %v1063
        %v1065 = vadd.f32 %v1058, 1.0
        %v1066 = vadd.f32 %v1060, 1.0
        %v1067 = vadd.f32 %v1062, 1.0
        %v1068 = vadd.f32 %v1064, 1.0
        %v1069 = vrcp.pop %v1065
        %v1070 = vmul.f32 1.0, %v1069
        %v1071 = vrcp.pop %v1066
        %v1072 = vmul.f32 1.0, %v1071
        %v1073 = vrcp.pop %v1067
        %v1074 = vmul.f32 1.0, %v1073
        %v1075 = vrcp.pop %v1068
        %v1076 = vmul.f32 1.0, %v1075
        %v1077 = vmax.f32 %v991, %v992
        %1078 = vmax.xlane.f32.xlu0 %v1077
        %v1079 = vpop.xlane.xlu0 %1078
        %v1080 = vmax.f32 %v993, %v994
        %1081 = vmax.xlane.f32.xlu0 %v1080
        %v1082 = vpop.xlane.xlu0 %1081
        %v1083 = vmax.f32 %v995, %v996
        %1084 = vmax.xlane.f32.xlu0 %v1083
        %v1085 = vpop.xlane.xlu0 %1084
        %v1086 = vmax.f32 %v997, %v998
        %1087 = vmax.xlane.f32.xlu0 %v1086
        %v1088 = vpop.xlane.xlu0 %1087
        %v1089 = vld [vmem:[%s4] sm:$0xff]
        %v1090 = vld [vmem:[%s4 + $0x8] sm:$0xff]
        %v1091 = vld [vmem:[%s4 + $0x10] sm:$0xff]
        %v1092 = vld [vmem:[%s4 + $0x18] sm:$0xff]
        %v1093 = vmul.f32 %v1089, %v1079
        %v1094 = vmul.f32 %v1090, %v1082
        %v1095 = vmul.f32 %v1091, %v1085
        %v1096 = vmul.f32 %v1092, %v1088
        %v1097 = vsel %vm475, %v1093, 0.0
        %v1098 = vsel %vm475, %v1094, 0.0
        %v1099 = vadd.f32 %v1097, %v1098
        %v1100 = vsel %vm475, %v1095, 0.0
        %v1101 = vadd.f32 %v1099, %v1100
        %v1102 = vsel %vm475, %v1096, 0.0
        %v1103 = vadd.f32 %v1101, %v1102
        %v1104 = vrot.slane %v1103, 4
        %v1105 = vadd.f32 %v1103, %v1104
        %v1106 = vrot.slane %v1105, 2
        %v1107 = vadd.f32 %v1105, %v1106
        %v1108 = vrot.slane %v1107, 1
        %v1109 = vadd.f32 %v1107, %v1108
        %v1110 = vmax.f32 %v1109, 0.0
        %v1111 = vld [vmem:[%s5] sm:$0xff]
        %v1112 = vld [vmem:[%s5 + $0x8] sm:$0xff]
        %v1113 = vld [vmem:[%s5 + $0x10] sm:$0xff]
        %v1114 = vld [vmem:[%s5 + $0x18] sm:$0xff]
        %v1115 = vmul.f32 %v1111, %v1110
        %v1116 = vmul.f32 %v1112, %v1110
        %v1117 = vmul.f32 %v1113, %v1110
        %v1118 = vmul.f32 %v1114, %v1110
        %v1119 = vsel %vm475, %v1115, 0.0
        %1120 = vadd.xlane.f32.xlu0 %v1119
        %v1121 = vpop.xlane.xlu0 %1120
        %v1122 = vsel %vm475, %v1116, 0.0
        %1123 = vadd.xlane.f32.xlu0 %v1122
        %v1124 = vpop.xlane.xlu0 %1123
        %v1125 = vsel %vm475, %v1117, 0.0
        %1126 = vadd.xlane.f32.xlu0 %v1125
        %v1127 = vpop.xlane.xlu0 %1126
        %v1128 = vsel %vm475, %v1118, 0.0
        %1129 = vadd.xlane.f32.xlu0 %v1128
        %v1130 = vpop.xlane.xlu0 %1129
        %v1131 = vxor.u32 %v1121, 2147483648
        %v1132 = vxor.u32 %v1124, 2147483648
        %v1133 = vxor.u32 %v1127, 2147483648
        %v1134 = vxor.u32 %v1130, 2147483648
        %v1135 = vmul.f32 %v1131, 1.442695
        %v1136 = vpow.pop %v1135
        %v1137 = vmul.f32 %v1132, 1.442695
        %v1138 = vpow.pop %v1137
        %v1139 = vmul.f32 %v1133, 1.442695
        %v1140 = vpow.pop %v1139
        %v1141 = vmul.f32 %v1134, 1.442695
        %v1142 = vpow.pop %v1141
        %v1143 = vadd.f32 %v1136, 1.0
        %v1144 = vadd.f32 %v1138, 1.0
        %v1145 = vadd.f32 %v1140, 1.0
        %v1146 = vadd.f32 %v1142, 1.0
        %v1147 = vrcp.pop %v1143
        %v1148 = vmul.f32 1.0, %v1147
        %v1149 = vrcp.pop %v1144
        %v1150 = vmul.f32 1.0, %v1149
        %v1151 = vrcp.pop %v1145
        %v1152 = vmul.f32 1.0, %v1151
        %v1153 = vrcp.pop %v1146
        %v1154 = vmul.f32 1.0, %v1153
        %v1155 = vmul.f32 %v396, %v1070
        %v1156 = vmul.f32 %v397, %v1070
        %v1157 = vmul.f32 %v398, %v1072
        %v1158 = vmul.f32 %v399, %v1072
        %v1159 = vmul.f32 %v400, %v1074
        %v1160 = vmul.f32 %v401, %v1074
        %v1161 = vmul.f32 %v402, %v1076
        %v1162 = vmul.f32 %v403, %v1076
        %1163 = vst [vmem:[%s383] sm:$0xff] %v1155
        %1164 = vst [vmem:[%s383 + $0x8] sm:$0xff] %v1156
        %1165 = vst [vmem:[%s383 + $0x10] sm:$0xff] %v1157
        %1166 = vst [vmem:[%s383 + $0x18] sm:$0xff] %v1158
        %1167 = vst [vmem:[%s383 + $0x20] sm:$0xff] %v1159
        %1168 = vst [vmem:[%s383 + $0x28] sm:$0xff] %v1160
        %1169 = vst [vmem:[%s383 + $0x30] sm:$0xff] %v1161
        %1170 = vst [vmem:[%s383 + $0x38] sm:$0xff] %v1162
        %v1171 = vmul.f32 %v404, %v1148
        %v1172 = vmul.f32 %v405, %v1148
        %v1173 = vmul.f32 %v406, %v1150
        %v1174 = vmul.f32 %v407, %v1150
        %v1175 = vmul.f32 %v408, %v1152
        %v1176 = vmul.f32 %v409, %v1152
        %v1177 = vmul.f32 %v410, %v1154
        %v1178 = vmul.f32 %v411, %v1154
        %1179 = vst [vmem:[%s390] sm:$0xff] %v1171
        %1180 = vst [vmem:[%s390 + $0x8] sm:$0xff] %v1172
        %1181 = vst [vmem:[%s390 + $0x10] sm:$0xff] %v1173
        %1182 = vst [vmem:[%s390 + $0x18] sm:$0xff] %v1174
        %1183 = vst [vmem:[%s390 + $0x20] sm:$0xff] %v1175
        %1184 = vst [vmem:[%s390 + $0x28] sm:$0xff] %v1176
        %1185 = vst [vmem:[%s390 + $0x30] sm:$0xff] %v1177
        %1186 = vst [vmem:[%s390 + $0x38] sm:$0xff] %v1178
        %s1187 = sand.u32 %s217, 1
        %s1188 = scalar_lea.sflag [#allocation4], %s1187
        %s1189 = sand.u32 %s217, 1
        %s1190 = smul.addr %s1189, 64
        %s1191 = scalar_lea.vmem [#allocation7], %s1190
        %s1192 = sand.u32 %s243, 1
        %s1193 = scalar_lea.sflag [#allocation9], %s1192
        %s1194 = sand.u32 %s243, 1
        %s1195 = smul.addr %s1194, 64
        %s1196 = scalar_lea.vmem [#allocation8], %s1195
        // Predicated region
        $region61: #{tpu_custom_call.1} parent=51 // pred_check
          %p1197 = pneg %p227
        $region62: #{tpu_custom_call.1} parent=51 // pred_check_branch
          %1199 = sbr.rel (%p1197) target = $region64
        $region63: #{tpu_custom_call.1} parent=51 // pred_region
          %s1201 = ssub.s32 1024, 1024
          %1202 = vsyncadd %s1188, %s1201
          %s1203 = smul.addr %s31, 8
          %s1204 = smul.addr %s1203, 128
          %s1205 = scalar_lea.hbm %s8, %s1204
          %s1206 = sshll.u32 %s1191, 4
          %s1207 = int_to_ptr.vmem [resolvable:$true] %s1206
          %1212 = dma.vmem_to_hbm [thread:$0]  %s1207, 1024, %s1205, %s1188, 256, 256, 16
        $region64: #{tpu_custom_call.1} parent=51 // pred_fallthru
          _
        // Predicated region
        $region65: #{tpu_custom_call.1} parent=51 // pred_check
          %p1213 = pneg %p253
        $region66: #{tpu_custom_call.1} parent=51 // pred_check_branch
          %1215 = sbr.rel (%p1213) target = $region68
        $region67: #{tpu_custom_call.1} parent=51 // pred_region
          %s1217 = ssub.s32 1024, 1024
          %1218 = vsyncadd %s1193, %s1217
          %s1219 = smul.addr %s31, 8
          %s1220 = smul.addr %s1219, 128
          %s1221 = scalar_lea.hbm %s9, %s1220
          %s1222 = sshll.u32 %s1196, 4
          %s1223 = int_to_ptr.vmem [resolvable:$true] %s1222
          %1228 = dma.vmem_to_hbm [thread:$0]  %s1223, 1024, %s1221, %s1193, 256, 256, 16
        $region68: #{tpu_custom_call.1} parent=51 // pred_fallthru
          _
      $region52: #{tpu_custom_call.1} parent=5 // pred_fallthru
        _
      %p1229 = scmp.le.s32.totalorder 2, %s26
      // Predicated region
      $region69: #{tpu_custom_call.1} parent=5 // pred_check
        %p1230 = pneg %p1229
      $region70: #{tpu_custom_call.1} parent=5 // pred_check_branch
        %1232 = sbr.rel (%p1230) target = $region72
      $region71: #{tpu_custom_call.1} parent=5 // pred_region
        %s1233 = ssub.s32 %s26, 2
        // Predicated region
        $region73: #{tpu_custom_call.1} parent=71 // pred_check
          %p1234 = pneg %p233
        $region74: #{tpu_custom_call.1} parent=71 // pred_check_branch
          %1236 = sbr.rel (%p1234) target = $region76
        $region75: #{tpu_custom_call.1} parent=71 // pred_region
          %s1237 = sand.u32 %s218, 1
          %s1238 = scalar_lea.sflag [#allocation4], %s1237
          %s1239 = sand.u32 %s218, 1
          %s1240 = smul.addr %s1239, 64
          %s1241 = scalar_lea.vmem [#allocation7], %s1240
          %1242 = dma.done %s1238, 1024
        $region76: #{tpu_custom_call.1} parent=71 // pred_fallthru
          _
        // Predicated region
        $region77: #{tpu_custom_call.1} parent=71 // pred_check
          %p1243 = pneg %p259
        $region78: #{tpu_custom_call.1} parent=71 // pred_check_branch
          %1245 = sbr.rel (%p1243) target = $region80
        $region79: #{tpu_custom_call.1} parent=71 // pred_region
          %s1246 = sand.u32 %s244, 1
          %s1247 = scalar_lea.sflag [#allocation9], %s1246
          %s1248 = sand.u32 %s244, 1
          %s1249 = smul.addr %s1248, 64
          %s1250 = scalar_lea.vmem [#allocation8], %s1249
          %1251 = dma.done %s1247, 1024
        $region80: #{tpu_custom_call.1} parent=71 // pred_fallthru
          _
      $region72: #{tpu_custom_call.1} parent=5 // pred_fallthru
        _
    $region6: #{tpu_custom_call.1} parent=1 // loop_footer
      %s30 = sadd.s32 1, %s26
    $region7: #{tpu_custom_call.1} parent=1 // loop_footer_branch
      %25 = sbr.rel target = $region3
    $region8: #{tpu_custom_call.1} parent=1 // loop_exit
      _
    %1252 = vsyncpa [#allocation3], 1
    %s1253 = scalar_lea.sflag [#allocation3], 1
    %1254 = vsyncpa %s1253, 1
    %1255 = vsyncpa [#allocation4], 1
    %s1256 = scalar_lea.sflag [#allocation4], 1
    %1257 = vsyncpa %s1256, 1
    %1258 = vsyncpa [#allocation9], 1
    %s1259 = scalar_lea.sflag [#allocation9], 1
    %1260 = vsyncpa %s1259, 1
    %1261 = vsyncpa [#allocation5], 1
    %s1262 = scalar_lea.sflag [#allocation5], 1
    %1263 = vsyncpa %s1262, 1

</llo_original>
